<compile_context>
chip_gen: v5e
topology: v5e:2x2
jax: 0.10.0
libtpu: 0.0.40
codegen_flags: <defaults>
</compile_context>

<pallas_src>
import math
from functools import partial

import jax
import jax.numpy as jnp
from jax.experimental import pallas as pl
from jax.experimental.pallas import tpu as pltpu


# ----------------------------------------------------------------------------
# Fused conv3x3 (stride 1, pad 1, bias) [+ optional PReLU], NCHW-flattened layout
# ----------------------------------------------------------------------------
def _conv3x3_kernel(x_ref, w_ref, b_ref, alpha_ref, o_ref, *, H, W, apply_prelu):
    # x_ref    : (1, Cin, L)     bf16, L = H*W + 2*W + 2  (row-padded, flattened,
    #                             plus one guard element at each end)
    # w_ref    : (Cout, 9*Cin)   bf16, tap-major (t = kh*3 + kw), channel fastest
    # b_ref    : (Cout, 1)       f32
    # alpha_ref: (1, 1)          f32 (SMEM)
    # o_ref    : (1, Cout, H*W)
    hw = H * W
    xf = x_ref[0].astype(jnp.float32)                       # (Cin, L)

    # column index of every output pixel (lane position % W), for column masking
    col = jax.lax.broadcasted_iota(jnp.int32, (1, hw), 1) % W

    # Build the 9 shifted taps from the padded block with static slices.
    # Padded flat index of image(r+kh-1, w+kw-1) is (kh*W + kw) + (r*W + w),
    # so tap (kh, kw) is simply xf[:, kh*W+kw : kh*W+kw+H*W].  Row boundaries are
    # handled by the zero halo rows; only column wrap-around needs masking.
    taps = []
    for kh in range(3):
        for kw in range(3):
            start = kh * W + kw
            tap = xf[:, start:start + hw]                   # (Cin, H*W)
            dw = kw - 1
            if dw != 0:
                valid = jnp.logical_and(col + dw >= 0, col + dw < W)
                tap = jnp.where(valid, tap, 0.0)
            taps.append(tap)

    # Fold the taps into the contraction: one MXU matmul with K = 9*Cin.
    lhs = jnp.concatenate(taps, axis=0).astype(jnp.bfloat16)            # (9*Cin, H*W)
    acc = jnp.dot(w_ref[...], lhs, preferred_element_type=jnp.float32)  # (Cout, H*W)
    acc = acc + b_ref[...]                                              # bias (f32)

    if apply_prelu:                                                     # fused PReLU
        a = alpha_ref[0, 0]
        acc = jnp.where(acc >= 0, acc, a * acc)

    o_ref[0] = acc.astype(o_ref.dtype)                                  # lane-dense store


def conv3x3_stage(x_nchw, w_oihw, bias, alpha, *, apply_prelu, out_dtype):
    """3x3 'same' conv + bias (+ optional fused PReLU) in NCHW. -> (N, Cout, H, W)."""
    n, cin, h, w = x_nchw.shape
    cout = w_oihw.shape[0]
    hw = h * w
    lpad = hw + 2 * w + 2                                   # padded flat length

    # Zero-pad one row top/bottom, flatten rows, add a guard element at each end.
    # (XLA fuses this with the preceding cast / pixel-shuffle, and it is ~the only
    #  glue pass left between kernels.)
    xp = jnp.pad(x_nchw, ((0, 0), (0, 0), (1, 1), (0, 0)))
    xp = xp.reshape(n, cin, (h + 2) * w)
    xp = jnp.pad(xp, ((0, 0), (0, 0), (1, 1))).astype(jnp.bfloat16)     # (N, Cin, L)

    # (Cout, Cin, 3, 3) -> (Cout, kh, kw, Cin) -> (Cout, 9*Cin): matches tap order.
    w2 = jnp.transpose(w_oihw, (0, 2, 3, 1)).reshape(cout, 9 * cin).astype(jnp.bfloat16)
    b2 = bias.reshape(cout, 1).astype(jnp.float32)
    a2 = jnp.reshape(alpha, (1, 1)).astype(jnp.float32)

    kernel = partial(_conv3x3_kernel, H=h, W=w, apply_prelu=apply_prelu)

    out = pl.pallas_call(
        kernel,
        out_shape=jax.ShapeDtypeStruct((n, cout, hw), out_dtype),
        grid_spec=pltpu.PrefetchScalarGridSpec(
            num_scalar_prefetch=0,
            grid=(n,),
            in_specs=[
                pl.BlockSpec((1, cin, lpad), lambda i: (i, 0, 0)),
                pl.BlockSpec((cout, 9 * cin), lambda i: (0, 0)),       # resident
                pl.BlockSpec((cout, 1), lambda i: (0, 0)),             # resident
                pl.BlockSpec(memory_space=pltpu.MemorySpace.SMEM),     # alpha scalar
            ],
            out_specs=pl.BlockSpec((1, cout, hw), lambda i: (i, 0, 0)),
        ),
        compiler_params=pltpu.CompilerParams(
            dimension_semantics=("parallel",),
        ),
    )(xp, w2, b2, a2)
    return out.reshape(n, cout, h, w)


# ----------------------------------------------------------------------------
# PixelShuffle(2) in NCHW (pure layout glue, matches torch.nn.PixelShuffle)
# ----------------------------------------------------------------------------
def pixel_shuffle_nchw(x, r=2):
    n, c_r2, h, w = x.shape
    c = c_r2 // (r * r)
    x = x.reshape(n, c, r, r, h, w)
    x = jnp.transpose(x, (0, 1, 4, 2, 5, 3))
    return x.reshape(n, c, h * r, w * r)


# ----------------------------------------------------------------------------
# Upsampler forward + deterministic parameter init (torch Conv2d / PReLU defaults)
# ----------------------------------------------------------------------------
def init_params(key, scale, n_feat, dtype=jnp.float32):
    n_stages = int(math.log(scale, 2))
    stages = []
    fan_in = n_feat * 3 * 3
    bound = 1.0 / math.sqrt(fan_in)
    for _ in range(n_stages):
        key, k1, k2 = jax.random.split(key, 3)
        w = jax.random.uniform(k1, (4 * n_feat, n_feat, 3, 3), dtype, -bound, bound)
        b = jax.random.uniform(k2, (4 * n_feat,), dtype, -bound, bound)
        stages.append((w, b))
    return {"stages": stages, "prelu_alpha": jnp.array(0.25, dtype)}


def upsampler_forward(x_nchw, params):
    """Matches Upsampler(scale, n_feat, bn=False, act='prelu').forward (NCHW io)."""
    stages = params["stages"]
    alpha = params["prelu_alpha"]
    if not stages:                       # degenerate scale == 1: just the PReLU
        return jnp.where(x_nchw >= 0, x_nchw, alpha * x_nchw)

    x = x_nchw
    last_idx = len(stages) - 1
    for s, (w, b) in enumerate(stages):
        last = s == last_idx
        y = conv3x3_stage(
            x, w, b, alpha,
            apply_prelu=last,                                   # fused final PReLU
            out_dtype=x_nchw.dtype if last else jnp.bfloat16,   # bf16 intermediates
        )
        x = pixel_shuffle_nchw(y, 2)
    return x


# ----------------------------------------------------------------------------
# Pure-JAX f32 reference for verification (independent PixelShuffle formulation)
# ----------------------------------------------------------------------------
def _ref_pixel_shuffle_nchw(x, r=2):
    # out[n, c, r*h + i, r*w + j] = x[n, c*r*r + i*r + j, h, w]  (torch semantics)
    n, c_r2, h, w = x.shape
    c = c_r2 // (r * r)
    out = jnp.zeros((n, c, h * r, w * r), x.dtype)
    for i in range(r):
        for j in range(r):
            out = out.at[:, :, i::r, j::r].set(x[:, i * r + j::r * r, :, :])
    return out


def _ref_forward(x_nchw, params):
    x = x_nchw.astype(jnp.float32)
    for (w, b) in params["stages"]:
        x = jax.lax.conv_general_dilated(
            x, w.astype(jnp.float32), window_strides=(1, 1),
            padding=((1, 1), (1, 1)),
            dimension_numbers=("NCHW", "OIHW", "NCHW"),
        ) + b[None, :, None, None]
        x = _ref_pixel_shuffle_nchw(x, 2)
    a = params["prelu_alpha"]
    return jnp.where(x >= 0, x, a * x)


if __name__ == "__main__":
    key = jax.random.PRNGKey(0)
    scale, n_feat = 4, 4                        # 2 upsampling stages (log2(4))
    pkey, xkey = jax.random.split(key)
    params = init_params(pkey, scale, n_feat)

    x = jax.random.normal(xkey, (2, n_feat, 16, 16), dtype=jnp.float32)   # NCHW

    fwd = jax.jit(upsampler_forward)
    out = jax.block_until_ready(fwd(x, params))

    assert out.shape == (2, n_feat, 16 * scale, 16 * scale), out.shape
    assert out.dtype == x.dtype, out.dtype

    ref = _ref_forward(x, params)
    err = float(jnp.max(jnp.abs(out - ref)))
    # bf16 matmul operands + bf16 inter-stage activations -> looser tol than pure f32
    assert err < 1e-1, f"mismatch vs reference: max abs err = {err}"

    print("KERNEL_OK")
</pallas_src>

<mosaic_0001>
module attributes {stable_mosaic.version = 11 : i64} {
  func.func @_conv3x3_kernel(%arg0: i32, %arg1: memref<1x4x290xbf16, #tpu.memory_space<vmem>>, %arg2: memref<16x36xbf16, #tpu.memory_space<vmem>>, %arg3: memref<16x1xf32, #tpu.memory_space<vmem>>, %arg4: memref<1x1xf32, #tpu.memory_space<smem>>, %arg5: memref<1x16x256xbf16, #tpu.memory_space<vmem>>) attributes {dimension_semantics = [#tpu.dimension_semantics<parallel>], iteration_bounds = array<i64: 2>, scalar_prefetch = 0 : i64, scratch_operands = 0 : i64, tpu.core_type = #tpu.core_type<tc>, window_params = [{transform_indices = @transform_0, window_bounds = array<i64: 1, 4, 290>}, {pipeline_mode = #tpu.pipeline_mode<synchronous>, transform_indices = @transform_1, window_bounds = array<i64: 16, 36>}, {pipeline_mode = #tpu.pipeline_mode<synchronous>, transform_indices = @transform_2, window_bounds = array<i64: 16, 1>}, {transform_indices = @transform_3, window_bounds = array<i64: 1, 1>}, {transform_indices = @transform_4, window_bounds = array<i64: 1, 16, 256>}]} {
    %c0 = arith.constant 0 : index
    %c0_0 = arith.constant 0 : index
    %c0_1 = arith.constant 0 : index
    %0 = vector.load %arg1[%c0, %c0_0, %c0_1] : memref<1x4x290xbf16, #tpu.memory_space<vmem>>, vector<1x4x290xbf16>
    %1 = vector.shape_cast %0 : vector<1x4x290xbf16> to vector<4x290xbf16>
    %2 = arith.extf %1 : vector<4x290xbf16> to vector<4x290xf32>
    %3 = tpu.iota {dimensions = array<i32: 1>} : vector<1x256xi32>
    %c16_i32 = arith.constant 16 : i32
    %c0_i32 = arith.constant 0 : i32
    %4 = arith.cmpi eq, %c16_i32, %c0_i32 : i32
    %c1_i32 = arith.constant 1 : i32
    %5 = arith.select %4, %c1_i32, %c16_i32 : i32
    %6 = vector.broadcast %5 : i32 to vector<1x256xi32>
    %7 = arith.remsi %3, %6 : vector<1x256xi32>
    %c0_i32_2 = arith.constant 0 : i32
    %8 = vector.broadcast %c0_i32_2 : i32 to vector<1x256xi32>
    %9 = arith.cmpi ne, %7, %8 : vector<1x256xi32>
    %c0_i32_3 = arith.constant 0 : i32
    %10 = vector.broadcast %c0_i32_3 : i32 to vector<1x256xi32>
    %11 = arith.cmpi slt, %7, %10 : vector<1x256xi32>
    %c0_i32_4 = arith.constant 0 : i32
    %12 = arith.cmpi slt, %5, %c0_i32_4 : i32
    %13 = vector.broadcast %12 : i1 to vector<1x256xi1>
    %14 = vector.broadcast %13 : vector<1x256xi1> to vector<1x256xi1>
    %15 = arith.xori %11, %14 : vector<1x256xi1>
    %16 = arith.andi %15, %9 : vector<1x256xi1>
    %17 = vector.broadcast %5 : i32 to vector<1x256xi32>
    %18 = arith.addi %7, %17 : vector<1x256xi32>
    %19 = arith.select %16, %18, %7 : vector<1x256xi1>, vector<1x256xi32>
    %20 = vector.extract_strided_slice %2 {offsets = [0, 0], sizes = [4, 256], strides = [1, 1]} : vector<4x290xf32> to vector<4x256xf32>
    %c-1_i32 = arith.constant -1 : i32
    %21 = vector.broadcast %c-1_i32 : i32 to vector<1x256xi32>
    %22 = arith.addi %19, %21 : vector<1x256xi32>
    %c0_i32_5 = arith.constant 0 : i32
    %23 = vector.broadcast %c0_i32_5 : i32 to vector<1x256xi32>
    %24 = arith.cmpi sge, %22, %23 : vector<1x256xi32>
    %c-1_i32_6 = arith.constant -1 : i32
    %25 = vector.broadcast %c-1_i32_6 : i32 to vector<1x256xi32>
    %26 = arith.addi %19, %25 : vector<1x256xi32>
    %c16_i32_7 = arith.constant 16 : i32
    %27 = vector.broadcast %c16_i32_7 : i32 to vector<1x256xi32>
    %28 = arith.cmpi slt, %26, %27 : vector<1x256xi32>
    %29 = arith.andi %24, %28 : vector<1x256xi1>
    %cst = arith.constant 0.000000e+00 : f32
    %30 = vector.shape_cast %29 : vector<1x256xi1> to vector<1x256xi1>
    %31 = vector.broadcast %30 : vector<1x256xi1> to vector<4x256xi1>
    %32 = vector.broadcast %cst : f32 to vector<4x256xf32>
    %33 = arith.select %31, %20, %32 : vector<4x256xi1>, vector<4x256xf32>
    %34 = vector.extract_strided_slice %2 {offsets = [0, 1], sizes = [4, 256], strides = [1, 1]} : vector<4x290xf32> to vector<4x256xf32>
    %35 = vector.extract_strided_slice %2 {offsets = [0, 2], sizes = [4, 256], strides = [1, 1]} : vector<4x290xf32> to vector<4x256xf32>
    %c1_i32_8 = arith.constant 1 : i32
    %36 = vector.broadcast %c1_i32_8 : i32 to vector<1x256xi32>
    %37 = arith.addi %19, %36 : vector<1x256xi32>
    %c0_i32_9 = arith.constant 0 : i32
    %38 = vector.broadcast %c0_i32_9 : i32 to vector<1x256xi32>
    %39 = arith.cmpi sge, %37, %38 : vector<1x256xi32>
    %c1_i32_10 = arith.constant 1 : i32
    %40 = vector.broadcast %c1_i32_10 : i32 to vector<1x256xi32>
    %41 = arith.addi %19, %40 : vector<1x256xi32>
    %c16_i32_11 = arith.constant 16 : i32
    %42 = vector.broadcast %c16_i32_11 : i32 to vector<1x256xi32>
    %43 = arith.cmpi slt, %41, %42 : vector<1x256xi32>
    %44 = arith.andi %39, %43 : vector<1x256xi1>
    %cst_12 = arith.constant 0.000000e+00 : f32
    %45 = vector.shape_cast %44 : vector<1x256xi1> to vector<1x256xi1>
    %46 = vector.broadcast %45 : vector<1x256xi1> to vector<4x256xi1>
    %47 = vector.broadcast %cst_12 : f32 to vector<4x256xf32>
    %48 = arith.select %46, %35, %47 : vector<4x256xi1>, vector<4x256xf32>
    %49 = vector.extract_strided_slice %2 {offsets = [0, 16], sizes = [4, 256], strides = [1, 1]} : vector<4x290xf32> to vector<4x256xf32>
    %c-1_i32_13 = arith.constant -1 : i32
    %50 = vector.broadcast %c-1_i32_13 : i32 to vector<1x256xi32>
    %51 = arith.addi %19, %50 : vector<1x256xi32>
    %c0_i32_14 = arith.constant 0 : i32
    %52 = vector.broadcast %c0_i32_14 : i32 to vector<1x256xi32>
    %53 = arith.cmpi sge, %51, %52 : vector<1x256xi32>
    %c-1_i32_15 = arith.constant -1 : i32
    %54 = vector.broadcast %c-1_i32_15 : i32 to vector<1x256xi32>
    %55 = arith.addi %19, %54 : vector<1x256xi32>
    %c16_i32_16 = arith.constant 16 : i32
    %56 = vector.broadcast %c16_i32_16 : i32 to vector<1x256xi32>
    %57 = arith.cmpi slt, %55, %56 : vector<1x256xi32>
    %58 = arith.andi %53, %57 : vector<1x256xi1>
    %cst_17 = arith.constant 0.000000e+00 : f32
    %59 = vector.shape_cast %58 : vector<1x256xi1> to vector<1x256xi1>
    %60 = vector.broadcast %59 : vector<1x256xi1> to vector<4x256xi1>
    %61 = vector.broadcast %cst_17 : f32 to vector<4x256xf32>
    %62 = arith.select %60, %49, %61 : vector<4x256xi1>, vector<4x256xf32>
    %63 = vector.extract_strided_slice %2 {offsets = [0, 17], sizes = [4, 256], strides = [1, 1]} : vector<4x290xf32> to vector<4x256xf32>
    %64 = vector.extract_strided_slice %2 {offsets = [0, 18], sizes = [4, 256], strides = [1, 1]} : vector<4x290xf32> to vector<4x256xf32>
    %c1_i32_18 = arith.constant 1 : i32
    %65 = vector.broadcast %c1_i32_18 : i32 to vector<1x256xi32>
    %66 = arith.addi %19, %65 : vector<1x256xi32>
    %c0_i32_19 = arith.constant 0 : i32
    %67 = vector.broadcast %c0_i32_19 : i32 to vector<1x256xi32>
    %68 = arith.cmpi sge, %66, %67 : vector<1x256xi32>
    %c1_i32_20 = arith.constant 1 : i32
    %69 = vector.broadcast %c1_i32_20 : i32 to vector<1x256xi32>
    %70 = arith.addi %19, %69 : vector<1x256xi32>
    %c16_i32_21 = arith.constant 16 : i32
    %71 = vector.broadcast %c16_i32_21 : i32 to vector<1x256xi32>
    %72 = arith.cmpi slt, %70, %71 : vector<1x256xi32>
    %73 = arith.andi %68, %72 : vector<1x256xi1>
    %cst_22 = arith.constant 0.000000e+00 : f32
    %74 = vector.shape_cast %73 : vector<1x256xi1> to vector<1x256xi1>
    %75 = vector.broadcast %74 : vector<1x256xi1> to vector<4x256xi1>
    %76 = vector.broadcast %cst_22 : f32 to vector<4x256xf32>
    %77 = arith.select %75, %64, %76 : vector<4x256xi1>, vector<4x256xf32>
    %78 = vector.extract_strided_slice %2 {offsets = [0, 32], sizes = [4, 256], strides = [1, 1]} : vector<4x290xf32> to vector<4x256xf32>
    %c-1_i32_23 = arith.constant -1 : i32
    %79 = vector.broadcast %c-1_i32_23 : i32 to vector<1x256xi32>
    %80 = arith.addi %19, %79 : vector<1x256xi32>
    %c0_i32_24 = arith.constant 0 : i32
    %81 = vector.broadcast %c0_i32_24 : i32 to vector<1x256xi32>
    %82 = arith.cmpi sge, %80, %81 : vector<1x256xi32>
    %c-1_i32_25 = arith.constant -1 : i32
    %83 = vector.broadcast %c-1_i32_25 : i32 to vector<1x256xi32>
    %84 = arith.addi %19, %83 : vector<1x256xi32>
    %c16_i32_26 = arith.constant 16 : i32
    %85 = vector.broadcast %c16_i32_26 : i32 to vector<1x256xi32>
    %86 = arith.cmpi slt, %84, %85 : vector<1x256xi32>
    %87 = arith.andi %82, %86 : vector<1x256xi1>
    %cst_27 = arith.constant 0.000000e+00 : f32
    %88 = vector.shape_cast %87 : vector<1x256xi1> to vector<1x256xi1>
    %89 = vector.broadcast %88 : vector<1x256xi1> to vector<4x256xi1>
    %90 = vector.broadcast %cst_27 : f32 to vector<4x256xf32>
    %91 = arith.select %89, %78, %90 : vector<4x256xi1>, vector<4x256xf32>
    %92 = vector.extract_strided_slice %2 {offsets = [0, 33], sizes = [4, 256], strides = [1, 1]} : vector<4x290xf32> to vector<4x256xf32>
    %93 = vector.extract_strided_slice %2 {offsets = [0, 34], sizes = [4, 256], strides = [1, 1]} : vector<4x290xf32> to vector<4x256xf32>
    %c1_i32_28 = arith.constant 1 : i32
    %94 = vector.broadcast %c1_i32_28 : i32 to vector<1x256xi32>
    %95 = arith.addi %19, %94 : vector<1x256xi32>
    %c0_i32_29 = arith.constant 0 : i32
    %96 = vector.broadcast %c0_i32_29 : i32 to vector<1x256xi32>
    %97 = arith.cmpi sge, %95, %96 : vector<1x256xi32>
    %c1_i32_30 = arith.constant 1 : i32
    %98 = vector.broadcast %c1_i32_30 : i32 to vector<1x256xi32>
    %99 = arith.addi %19, %98 : vector<1x256xi32>
    %c16_i32_31 = arith.constant 16 : i32
    %100 = vector.broadcast %c16_i32_31 : i32 to vector<1x256xi32>
    %101 = arith.cmpi slt, %99, %100 : vector<1x256xi32>
    %102 = arith.andi %97, %101 : vector<1x256xi1>
    %cst_32 = arith.constant 0.000000e+00 : f32
    %103 = vector.shape_cast %102 : vector<1x256xi1> to vector<1x256xi1>
    %104 = vector.broadcast %103 : vector<1x256xi1> to vector<4x256xi1>
    %105 = vector.broadcast %cst_32 : f32 to vector<4x256xf32>
    %106 = arith.select %104, %93, %105 : vector<4x256xi1>, vector<4x256xf32>
    %107 = tpu.concatenate %33, %34, %48, %62, %63, %77, %91, %92, %106 in 0 : vector<4x256xf32>, vector<4x256xf32>, vector<4x256xf32>, vector<4x256xf32>, vector<4x256xf32>, vector<4x256xf32>, vector<4x256xf32>, vector<4x256xf32>, vector<4x256xf32> -> vector<36x256xf32>
    %108 = arith.truncf %107 : vector<36x256xf32> to vector<36x256xbf16>
    %c0_33 = arith.constant 0 : index
    %c0_34 = arith.constant 0 : index
    %109 = vector.load %arg2[%c0_33, %c0_34] : memref<16x36xbf16, #tpu.memory_space<vmem>>, vector<16x36xbf16>
    %cst_35 = arith.constant dense<0.000000e+00> : vector<16x256xf32>
    %110 = tpu.matmul %109, %108, %cst_35 {dimension_numbers = #tpu.dot_dimension_numbers<[1], [0], [0], [1], [0, 0, 1, 1], [], []>} : vector<16x36xbf16>, vector<36x256xbf16>, vector<16x256xf32> -> vector<16x256xf32>
    %c0_36 = arith.constant 0 : index
    %c0_37 = arith.constant 0 : index
    %111 = vector.load %arg3[%c0_36, %c0_37] : memref<16x1xf32, #tpu.memory_space<vmem>>, vector<16x1xf32>
    %112 = vector.broadcast %111 : vector<16x1xf32> to vector<16x256xf32>
    %113 = arith.addf %110, %112 : vector<16x256xf32>
    %114 = arith.truncf %113 : vector<16x256xf32> to vector<16x256xbf16>
    %c0_38 = arith.constant 0 : index
    %c0_39 = arith.constant 0 : index
    %c0_40 = arith.constant 0 : index
    %115 = vector.load %arg5[%c0_38, %c0_39, %c0_40] : memref<1x16x256xbf16, #tpu.memory_space<vmem>>, vector<1x16x256xbf16>
    %116 = vector.shape_cast %115 : vector<1x16x256xbf16> to vector<16x256xbf16>
    %117 = vector.shape_cast %114 : vector<16x256xbf16> to vector<1x16x256xbf16>
    tpu.vector_store %arg5[%c0_38, %c0_39, %c0_40], %117 {strides = array<i32>} : memref<1x16x256xbf16, #tpu.memory_space<vmem>>, vector<1x16x256xbf16>,
    return
  }
  func.func @transform_0(%arg0: i32) -> (i32, i32, i32) {
    %c0_i32 = arith.constant 0 : i32
    %c0_i32_0 = arith.constant 0 : i32
    %c0_i32_1 = arith.constant 0 : i32
    return %arg0, %c0_i32, %c0_i32_0 : i32, i32, i32
  }
  func.func @transform_1(%arg0: i32) -> (i32, i32) {
    %c0_i32 = arith.constant 0 : i32
    %c0_i32_0 = arith.constant 0 : i32
    %c0_i32_1 = arith.constant 0 : i32
    return %c0_i32, %c0_i32_0 : i32, i32
  }
  func.func @transform_2(%arg0: i32) -> (i32, i32) {
    %c0_i32 = arith.constant 0 : i32
    %c0_i32_0 = arith.constant 0 : i32
    %c0_i32_1 = arith.constant 0 : i32
    return %c0_i32, %c0_i32_0 : i32, i32
  }
  func.func @transform_3(%arg0: i32) -> (i32, i32) {
    %c0_i32 = arith.constant 0 : i32
    %c0_i32_0 = arith.constant 0 : i32
    %c0_i32_1 = arith.constant 0 : i32
    return %c0_i32, %c0_i32_0 : i32, i32
  }
  func.func @transform_4(%arg0: i32) -> (i32, i32, i32) {
    %c0_i32 = arith.constant 0 : i32
    %c0_i32_0 = arith.constant 0 : i32
    %c0_i32_1 = arith.constant 0 : i32
    return %arg0, %c0_i32, %c0_i32_0 : i32, i32, i32
  }
}

module attributes {stable_mosaic.version = 11 : i64} {
  func.func @_conv3x3_kernel(%arg0: i32, %arg1: memref<1x4x1090xbf16, #tpu.memory_space<vmem>>, %arg2: memref<16x36xbf16, #tpu.memory_space<vmem>>, %arg3: memref<16x1xf32, #tpu.memory_space<vmem>>, %arg4: memref<1x1xf32, #tpu.memory_space<smem>>, %arg5: memref<1x16x1024xf32, #tpu.memory_space<vmem>>) attributes {dimension_semantics = [#tpu.dimension_semantics<parallel>], iteration_bounds = array<i64: 2>, scalar_prefetch = 0 : i64, scratch_operands = 0 : i64, tpu.core_type = #tpu.core_type<tc>, window_params = [{transform_indices = @transform_0, window_bounds = array<i64: 1, 4, 1090>}, {pipeline_mode = #tpu.pipeline_mode<synchronous>, transform_indices = @transform_1, window_bounds = array<i64: 16, 36>}, {pipeline_mode = #tpu.pipeline_mode<synchronous>, transform_indices = @transform_2, window_bounds = array<i64: 16, 1>}, {transform_indices = @transform_3, window_bounds = array<i64: 1, 1>}, {transform_indices = @transform_4, window_bounds = array<i64: 1, 16, 1024>}]} {
    %c0 = arith.constant 0 : index
    %c0_0 = arith.constant 0 : index
    %c0_1 = arith.constant 0 : index
    %0 = vector.load %arg1[%c0, %c0_0, %c0_1] : memref<1x4x1090xbf16, #tpu.memory_space<vmem>>, vector<1x4x1090xbf16>
    %1 = vector.shape_cast %0 : vector<1x4x1090xbf16> to vector<4x1090xbf16>
    %2 = arith.extf %1 : vector<4x1090xbf16> to vector<4x1090xf32>
    %3 = tpu.iota {dimensions = array<i32: 1>} : vector<1x1024xi32>
    %c32_i32 = arith.constant 32 : i32
    %c0_i32 = arith.constant 0 : i32
    %4 = arith.cmpi eq, %c32_i32, %c0_i32 : i32
    %c1_i32 = arith.constant 1 : i32
    %5 = arith.select %4, %c1_i32, %c32_i32 : i32
    %6 = vector.broadcast %5 : i32 to vector<1x1024xi32>
    %7 = arith.remsi %3, %6 : vector<1x1024xi32>
    %c0_i32_2 = arith.constant 0 : i32
    %8 = vector.broadcast %c0_i32_2 : i32 to vector<1x1024xi32>
    %9 = arith.cmpi ne, %7, %8 : vector<1x1024xi32>
    %c0_i32_3 = arith.constant 0 : i32
    %10 = vector.broadcast %c0_i32_3 : i32 to vector<1x1024xi32>
    %11 = arith.cmpi slt, %7, %10 : vector<1x1024xi32>
    %c0_i32_4 = arith.constant 0 : i32
    %12 = arith.cmpi slt, %5, %c0_i32_4 : i32
    %13 = vector.broadcast %12 : i1 to vector<1x1024xi1>
    %14 = vector.broadcast %13 : vector<1x1024xi1> to vector<1x1024xi1>
    %15 = arith.xori %11, %14 : vector<1x1024xi1>
    %16 = arith.andi %15, %9 : vector<1x1024xi1>
    %17 = vector.broadcast %5 : i32 to vector<1x1024xi32>
    %18 = arith.addi %7, %17 : vector<1x1024xi32>
    %19 = arith.select %16, %18, %7 : vector<1x1024xi1>, vector<1x1024xi32>
    %20 = vector.extract_strided_slice %2 {offsets = [0, 0], sizes = [4, 1024], strides = [1, 1]} : vector<4x1090xf32> to vector<4x1024xf32>
    %c-1_i32 = arith.constant -1 : i32
    %21 = vector.broadcast %c-1_i32 : i32 to vector<1x1024xi32>
    %22 = arith.addi %19, %21 : vector<1x1024xi32>
    %c0_i32_5 = arith.constant 0 : i32
    %23 = vector.broadcast %c0_i32_5 : i32 to vector<1x1024xi32>
    %24 = arith.cmpi sge, %22, %23 : vector<1x1024xi32>
    %c-1_i32_6 = arith.constant -1 : i32
    %25 = vector.broadcast %c-1_i32_6 : i32 to vector<1x1024xi32>
    %26 = arith.addi %19, %25 : vector<1x1024xi32>
    %c32_i32_7 = arith.constant 32 : i32
    %27 = vector.broadcast %c32_i32_7 : i32 to vector<1x1024xi32>
    %28 = arith.cmpi slt, %26, %27 : vector<1x1024xi32>
    %29 = arith.andi %24, %28 : vector<1x1024xi1>
    %cst = arith.constant 0.000000e+00 : f32
    %30 = vector.shape_cast %29 : vector<1x1024xi1> to vector<1x1024xi1>
    %31 = vector.broadcast %30 : vector<1x1024xi1> to vector<4x1024xi1>
    %32 = vector.broadcast %cst : f32 to vector<4x1024xf32>
    %33 = arith.select %31, %20, %32 : vector<4x1024xi1>, vector<4x1024xf32>
    %34 = vector.extract_strided_slice %2 {offsets = [0, 1], sizes = [4, 1024], strides = [1, 1]} : vector<4x1090xf32> to vector<4x1024xf32>
    %35 = vector.extract_strided_slice %2 {offsets = [0, 2], sizes = [4, 1024], strides = [1, 1]} : vector<4x1090xf32> to vector<4x1024xf32>
    %c1_i32_8 = arith.constant 1 : i32
    %36 = vector.broadcast %c1_i32_8 : i32 to vector<1x1024xi32>
    %37 = arith.addi %19, %36 : vector<1x1024xi32>
    %c0_i32_9 = arith.constant 0 : i32
    %38 = vector.broadcast %c0_i32_9 : i32 to vector<1x1024xi32>
    %39 = arith.cmpi sge, %37, %38 : vector<1x1024xi32>
    %c1_i32_10 = arith.constant 1 : i32
    %40 = vector.broadcast %c1_i32_10 : i32 to vector<1x1024xi32>
    %41 = arith.addi %19, %40 : vector<1x1024xi32>
    %c32_i32_11 = arith.constant 32 : i32
    %42 = vector.broadcast %c32_i32_11 : i32 to vector<1x1024xi32>
    %43 = arith.cmpi slt, %41, %42 : vector<1x1024xi32>
    %44 = arith.andi %39, %43 : vector<1x1024xi1>
    %cst_12 = arith.constant 0.000000e+00 : f32
    %45 = vector.shape_cast %44 : vector<1x1024xi1> to vector<1x1024xi1>
    %46 = vector.broadcast %45 : vector<1x1024xi1> to vector<4x1024xi1>
    %47 = vector.broadcast %cst_12 : f32 to vector<4x1024xf32>
    %48 = arith.select %46, %35, %47 : vector<4x1024xi1>, vector<4x1024xf32>
    %49 = vector.extract_strided_slice %2 {offsets = [0, 32], sizes = [4, 1024], strides = [1, 1]} : vector<4x1090xf32> to vector<4x1024xf32>
    %c-1_i32_13 = arith.constant -1 : i32
    %50 = vector.broadcast %c-1_i32_13 : i32 to vector<1x1024xi32>
    %51 = arith.addi %19, %50 : vector<1x1024xi32>
    %c0_i32_14 = arith.constant 0 : i32
    %52 = vector.broadcast %c0_i32_14 : i32 to vector<1x1024xi32>
    %53 = arith.cmpi sge, %51, %52 : vector<1x1024xi32>
    %c-1_i32_15 = arith.constant -1 : i32
    %54 = vector.broadcast %c-1_i32_15 : i32 to vector<1x1024xi32>
    %55 = arith.addi %19, %54 : vector<1x1024xi32>
    %c32_i32_16 = arith.constant 32 : i32
    %56 = vector.broadcast %c32_i32_16 : i32 to vector<1x1024xi32>
    %57 = arith.cmpi slt, %55, %56 : vector<1x1024xi32>
    %58 = arith.andi %53, %57 : vector<1x1024xi1>
    %cst_17 = arith.constant 0.000000e+00 : f32
    %59 = vector.shape_cast %58 : vector<1x1024xi1> to vector<1x1024xi1>
    %60 = vector.broadcast %59 : vector<1x1024xi1> to vector<4x1024xi1>
    %61 = vector.broadcast %cst_17 : f32 to vector<4x1024xf32>
    %62 = arith.select %60, %49, %61 : vector<4x1024xi1>, vector<4x1024xf32>
    %63 = vector.extract_strided_slice %2 {offsets = [0, 33], sizes = [4, 1024], strides = [1, 1]} : vector<4x1090xf32> to vector<4x1024xf32>
    %64 = vector.extract_strided_slice %2 {offsets = [0, 34], sizes = [4, 1024], strides = [1, 1]} : vector<4x1090xf32> to vector<4x1024xf32>
    %c1_i32_18 = arith.constant 1 : i32
    %65 = vector.broadcast %c1_i32_18 : i32 to vector<1x1024xi32>
    %66 = arith.addi %19, %65 : vector<1x1024xi32>
    %c0_i32_19 = arith.constant 0 : i32
    %67 = vector.broadcast %c0_i32_19 : i32 to vector<1x1024xi32>
    %68 = arith.cmpi sge, %66, %67 : vector<1x1024xi32>
    %c1_i32_20 = arith.constant 1 : i32
    %69 = vector.broadcast %c1_i32_20 : i32 to vector<1x1024xi32>
    %70 = arith.addi %19, %69 : vector<1x1024xi32>
    %c32_i32_21 = arith.constant 32 : i32
    %71 = vector.broadcast %c32_i32_21 : i32 to vector<1x1024xi32>
    %72 = arith.cmpi slt, %70, %71 : vector<1x1024xi32>
    %73 = arith.andi %68, %72 : vector<1x1024xi1>
    %cst_22 = arith.constant 0.000000e+00 : f32
    %74 = vector.shape_cast %73 : vector<1x1024xi1> to vector<1x1024xi1>
    %75 = vector.broadcast %74 : vector<1x1024xi1> to vector<4x1024xi1>
    %76 = vector.broadcast %cst_22 : f32 to vector<4x1024xf32>
    %77 = arith.select %75, %64, %76 : vector<4x1024xi1>, vector<4x1024xf32>
    %78 = vector.extract_strided_slice %2 {offsets = [0, 64], sizes = [4, 1024], strides = [1, 1]} : vector<4x1090xf32> to vector<4x1024xf32>
    %c-1_i32_23 = arith.constant -1 : i32
    %79 = vector.broadcast %c-1_i32_23 : i32 to vector<1x1024xi32>
    %80 = arith.addi %19, %79 : vector<1x1024xi32>
    %c0_i32_24 = arith.constant 0 : i32
    %81 = vector.broadcast %c0_i32_24 : i32 to vector<1x1024xi32>
    %82 = arith.cmpi sge, %80, %81 : vector<1x1024xi32>
    %c-1_i32_25 = arith.constant -1 : i32
    %83 = vector.broadcast %c-1_i32_25 : i32 to vector<1x1024xi32>
    %84 = arith.addi %19, %83 : vector<1x1024xi32>
    %c32_i32_26 = arith.constant 32 : i32
    %85 = vector.broadcast %c32_i32_26 : i32 to vector<1x1024xi32>
    %86 = arith.cmpi slt, %84, %85 : vector<1x1024xi32>
    %87 = arith.andi %82, %86 : vector<1x1024xi1>
    %cst_27 = arith.constant 0.000000e+00 : f32
    %88 = vector.shape_cast %87 : vector<1x1024xi1> to vector<1x1024xi1>
    %89 = vector.broadcast %88 : vector<1x1024xi1> to vector<4x1024xi1>
    %90 = vector.broadcast %cst_27 : f32 to vector<4x1024xf32>
    %91 = arith.select %89, %78, %90 : vector<4x1024xi1>, vector<4x1024xf32>
    %92 = vector.extract_strided_slice %2 {offsets = [0, 65], sizes = [4, 1024], strides = [1, 1]} : vector<4x1090xf32> to vector<4x1024xf32>
    %93 = vector.extract_strided_slice %2 {offsets = [0, 66], sizes = [4, 1024], strides = [1, 1]} : vector<4x1090xf32> to vector<4x1024xf32>
    %c1_i32_28 = arith.constant 1 : i32
    %94 = vector.broadcast %c1_i32_28 : i32 to vector<1x1024xi32>
    %95 = arith.addi %19, %94 : vector<1x1024xi32>
    %c0_i32_29 = arith.constant 0 : i32
    %96 = vector.broadcast %c0_i32_29 : i32 to vector<1x1024xi32>
    %97 = arith.cmpi sge, %95, %96 : vector<1x1024xi32>
    %c1_i32_30 = arith.constant 1 : i32
    %98 = vector.broadcast %c1_i32_30 : i32 to vector<1x1024xi32>
    %99 = arith.addi %19, %98 : vector<1x1024xi32>
    %c32_i32_31 = arith.constant 32 : i32
    %100 = vector.broadcast %c32_i32_31 : i32 to vector<1x1024xi32>
    %101 = arith.cmpi slt, %99, %100 : vector<1x1024xi32>
    %102 = arith.andi %97, %101 : vector<1x1024xi1>
    %cst_32 = arith.constant 0.000000e+00 : f32
    %103 = vector.shape_cast %102 : vector<1x1024xi1> to vector<1x1024xi1>
    %104 = vector.broadcast %103 : vector<1x1024xi1> to vector<4x1024xi1>
    %105 = vector.broadcast %cst_32 : f32 to vector<4x1024xf32>
    %106 = arith.select %104, %93, %105 : vector<4x1024xi1>, vector<4x1024xf32>
    %107 = tpu.concatenate %33, %34, %48, %62, %63, %77, %91, %92, %106 in 0 : vector<4x1024xf32>, vector<4x1024xf32>, vector<4x1024xf32>, vector<4x1024xf32>, vector<4x1024xf32>, vector<4x1024xf32>, vector<4x1024xf32>, vector<4x1024xf32>, vector<4x1024xf32> -> vector<36x1024xf32>
    %108 = arith.truncf %107 : vector<36x1024xf32> to vector<36x1024xbf16>
    %c0_33 = arith.constant 0 : index
    %c0_34 = arith.constant 0 : index
    %109 = vector.load %arg2[%c0_33, %c0_34] : memref<16x36xbf16, #tpu.memory_space<vmem>>, vector<16x36xbf16>
    %cst_35 = arith.constant dense<0.000000e+00> : vector<16x1024xf32>
    %110 = tpu.matmul %109, %108, %cst_35 {dimension_numbers = #tpu.dot_dimension_numbers<[1], [0], [0], [1], [0, 0, 1, 1], [], []>} : vector<16x36xbf16>, vector<36x1024xbf16>, vector<16x1024xf32> -> vector<16x1024xf32>
    %c0_36 = arith.constant 0 : index
    %c0_37 = arith.constant 0 : index
    %111 = vector.load %arg3[%c0_36, %c0_37] : memref<16x1xf32, #tpu.memory_space<vmem>>, vector<16x1xf32>
    %112 = vector.broadcast %111 : vector<16x1xf32> to vector<16x1024xf32>
    %113 = arith.addf %110, %112 : vector<16x1024xf32>
    %c0_38 = arith.constant 0 : index
    %c0_39 = arith.constant 0 : index
    %114 = memref.load %arg4[%c0_38, %c0_39] : memref<1x1xf32, #tpu.memory_space<smem>>
    %cst_40 = arith.constant 0.000000e+00 : f32
    %115 = vector.broadcast %cst_40 : f32 to vector<16x1024xf32>
    %116 = arith.cmpf oge, %113, %115 : vector<16x1024xf32>
    %117 = vector.broadcast %114 : f32 to vector<16x1024xf32>
    %118 = arith.mulf %117, %113 : vector<16x1024xf32>
    %119 = arith.select %116, %113, %118 : vector<16x1024xi1>, vector<16x1024xf32>
    %c0_41 = arith.constant 0 : index
    %c0_42 = arith.constant 0 : index
    %c0_43 = arith.constant 0 : index
    %120 = vector.load %arg5[%c0_41, %c0_42, %c0_43] : memref<1x16x1024xf32, #tpu.memory_space<vmem>>, vector<1x16x1024xf32>
    %121 = vector.shape_cast %120 : vector<1x16x1024xf32> to vector<16x1024xf32>
    %122 = vector.shape_cast %119 : vector<16x1024xf32> to vector<1x16x1024xf32>
    tpu.vector_store %arg5[%c0_41, %c0_42, %c0_43], %122 {strides = array<i32>} : memref<1x16x1024xf32, #tpu.memory_space<vmem>>, vector<1x16x1024xf32>,
    return
  }
  func.func @transform_0(%arg0: i32) -> (i32, i32, i32) {
    %c0_i32 = arith.constant 0 : i32
    %c0_i32_0 = arith.constant 0 : i32
    %c0_i32_1 = arith.constant 0 : i32
    return %arg0, %c0_i32, %c0_i32_0 : i32, i32, i32
  }
  func.func @transform_1(%arg0: i32) -> (i32, i32) {
    %c0_i32 = arith.constant 0 : i32
    %c0_i32_0 = arith.constant 0 : i32
    %c0_i32_1 = arith.constant 0 : i32
    return %c0_i32, %c0_i32_0 : i32, i32
  }
  func.func @transform_2(%arg0: i32) -> (i32, i32) {
    %c0_i32 = arith.constant 0 : i32
    %c0_i32_0 = arith.constant 0 : i32
    %c0_i32_1 = arith.constant 0 : i32
    return %c0_i32, %c0_i32_0 : i32, i32
  }
  func.func @transform_3(%arg0: i32) -> (i32, i32) {
    %c0_i32 = arith.constant 0 : i32
    %c0_i32_0 = arith.constant 0 : i32
    %c0_i32_1 = arith.constant 0 : i32
    return %c0_i32, %c0_i32_0 : i32, i32
  }
  func.func @transform_4(%arg0: i32) -> (i32, i32, i32) {
    %c0_i32 = arith.constant 0 : i32
    %c0_i32_0 = arith.constant 0 : i32
    %c0_i32_1 = arith.constant 0 : i32
    return %arg0, %c0_i32, %c0_i32_0 : i32, i32, i32
  }
}

</mosaic_0001>

<llo_original>
// kernel: upsampler_forward.2
$region0: #{upsampler_forward.2}
  #allocation0 [shape = 'u32[]', space=smem, size = 0x4, offset = 0x4, fixed_abs, tag = 'smem constant byte address 0x4 - core index']
  #allocation1 [shape = 'u32[72,128]{1,0:T(1,128)}', space=vmem, size = 0x9000, scoped, tag = 'internal scratch']
  #allocation2 [shape = 'f32[1,1]{1,0:T(1,128)S(6)}', space=smem, size = 0x200, scoped, tag = 'scoped memory for upsampler_forward.2']
  %s0 = inlined_call_operand.vmem [shape: bf16[2,4,290], index: 0, kind: input, shape index: {}]
  %s1 = inlined_call_operand.vmem [shape: bf16[16,36], index: 1, kind: input, shape index: {}]
  %s2 = inlined_call_operand.vmem [shape: f32[16,1], index: 2, kind: input, shape index: {}]
  %s3 = inlined_call_operand.<no memory space> [shape: f32[1,1], index: 3, kind: input, shape index: {}]
  %s4 = inlined_call_operand.vmem [shape: bf16[2,16,256], index: 4, kind: output, shape index: {}]
  %s5 = sld [smem:[#allocation0]]
  $region49: #{upsampler_forward.2} parent=0
    _
  %s7 = ssub.s32 1, %s5
  %s8 = scalar_select 0, %s7, %s5
  %9 = sst [smem:[#allocation2]] %s3
  loop: start=0, step=1, limit=4
  $region2: #{upsampler_forward.2} parent=0 // loop_pre_header
    _
  $region3: #{upsampler_forward.2} parent=0 // loop_header
    %s11 = sphi 0, %s15
    %p12 = scmp.ge.s32.totalorder %s11, 4
    %s21 = sphi 0, %s23
    %s24 = sphi 0, %s21
    %s25 = sphi 0, %s24
    %s41 = sphi 0, %s25
    %s45 = sphi 0, %s45
    %s47 = sphi 0, %s45
    %s48 = sphi 0, %s47
    %s62 = sphi 0, %s48
    %s66 = sphi 0, %s66
    %s68 = sphi 0, %s66
    %s69 = sphi 0, %s68
    %s83 = sphi 0, %s69
    %s87 = sphi 0, %s87
    %s89 = sphi 0, %s87
    %s90 = sphi 0, %s89
    %s104 = sphi 0, %s90
    %s110 = sphi 0, %s112
    %s113 = sphi 0, %s110
    %s114 = sphi 0, %s113
    %s130 = sphi 0, %s114
  $region4: #{upsampler_forward.2} parent=0 // loop_header_branch
    %14 = sbr.rel (%p12) target = $region8
  $region5: #{upsampler_forward.2} parent=0 // loop_body
    %s16 = ssub.s32 %s11, 1
    %s17 = ssub.s32 %s11, 2
    %s18 = sadd.s32 %s11, 1
    %s19 = ssub.s32 %s11, %s18
    %p20 = scmp.eq.s32.totalorder %s19, 0
    %s22 = sadd.s32 %s21, 1
    %s23 = scalar_select %p20, %s21, %s22
    %p26 = pneg %p20
    %p27 = scmp.eq.s32.totalorder %s11, 1
    %p28 = por %p26, %p27
    %p29 = scmp.ne.s32.totalorder %s21, %s24
    %p30 = scmp.eq.s32.totalorder %s11, 0
    %p31 = por %p29, %p30
    %p32 = scmp.ne.s32.totalorder %s21, %s24
    %p33 = scmp.eq.s32.totalorder %s16, 1
    %p34 = por %p32, %p33
    %p35 = scmp.ne.s32.totalorder %s24, %s25
    %p36 = scmp.eq.s32.totalorder %s16, 0
    %p37 = por %p35, %p36
    %p38 = scmp.ne.s32.totalorder %s24, %s25
    %p39 = scmp.eq.s32.totalorder %s17, 1
    %p40 = por %p38, %p39
    %p42 = scmp.ne.s32.totalorder %s25, %s41
    %p43 = scmp.eq.s32.totalorder %s17, 0
    %p44 = por %p42, %p43
    %s46 = sadd.s32 %s45, 1
    %p49 = scmp.eq.s32.totalorder %s11, 1
    %p50 = scmp.ne.s32.totalorder %s45, %s47
    %p51 = scmp.eq.s32.totalorder %s11, 0
    %p52 = por %p50, %p51
    %p53 = scmp.ne.s32.totalorder %s45, %s47
    %p54 = scmp.eq.s32.totalorder %s16, 1
    %p55 = por %p53, %p54
    %p56 = scmp.ne.s32.totalorder %s47, %s48
    %p57 = scmp.eq.s32.totalorder %s16, 0
    %p58 = por %p56, %p57
    %p59 = scmp.ne.s32.totalorder %s47, %s48
    %p60 = scmp.eq.s32.totalorder %s17, 1
    %p61 = por %p59, %p60
    %p63 = scmp.ne.s32.totalorder %s48, %s62
    %p64 = scmp.eq.s32.totalorder %s17, 0
    %p65 = por %p63, %p64
    %s67 = sadd.s32 %s66, 1
    %p70 = scmp.eq.s32.totalorder %s11, 1
    %p71 = scmp.ne.s32.totalorder %s66, %s68
    %p72 = scmp.eq.s32.totalorder %s11, 0
    %p73 = por %p71, %p72
    %p74 = scmp.ne.s32.totalorder %s66, %s68
    %p75 = scmp.eq.s32.totalorder %s16, 1
    %p76 = por %p74, %p75
    %p77 = scmp.ne.s32.totalorder %s68, %s69
    %p78 = scmp.eq.s32.totalorder %s16, 0
    %p79 = por %p77, %p78
    %p80 = scmp.ne.s32.totalorder %s68, %s69
    %p81 = scmp.eq.s32.totalorder %s17, 1
    %p82 = por %p80, %p81
    %p84 = scmp.ne.s32.totalorder %s69, %s83
    %p85 = scmp.eq.s32.totalorder %s17, 0
    %p86 = por %p84, %p85
    %s88 = sadd.s32 %s87, 1
    %p91 = scmp.eq.s32.totalorder %s11, 1
    %p92 = scmp.ne.s32.totalorder %s87, %s89
    %p93 = scmp.eq.s32.totalorder %s11, 0
    %p94 = por %p92, %p93
    %p95 = scmp.ne.s32.totalorder %s87, %s89
    %p96 = scmp.eq.s32.totalorder %s16, 1
    %p97 = por %p95, %p96
    %p98 = scmp.ne.s32.totalorder %s89, %s90
    %p99 = scmp.eq.s32.totalorder %s16, 0
    %p100 = por %p98, %p99
    %p101 = scmp.ne.s32.totalorder %s89, %s90
    %p102 = scmp.eq.s32.totalorder %s17, 1
    %p103 = por %p101, %p102
    %p105 = scmp.ne.s32.totalorder %s90, %s104
    %p106 = scmp.eq.s32.totalorder %s17, 0
    %p107 = por %p105, %p106
    %s108 = ssub.s32 %s11, %s18
    %p109 = scmp.eq.s32.totalorder %s108, 0
    %s111 = sadd.s32 %s110, 1
    %s112 = scalar_select %p109, %s110, %s111
    %p115 = pneg %p109
    %p116 = scmp.eq.s32.totalorder %s11, 1
    %p117 = por %p115, %p116
    %p118 = scmp.ne.s32.totalorder %s110, %s113
    %p119 = scmp.eq.s32.totalorder %s11, 0
    %p120 = por %p118, %p119
    %p121 = scmp.ne.s32.totalorder %s110, %s113
    %p122 = scmp.eq.s32.totalorder %s16, 1
    %p123 = por %p121, %p122
    %p124 = scmp.ne.s32.totalorder %s113, %s114
    %p125 = scmp.eq.s32.totalorder %s16, 0
    %p126 = por %p124, %p125
    %p127 = scmp.ne.s32.totalorder %s113, %s114
    %p128 = scmp.eq.s32.totalorder %s17, 1
    %p129 = por %p127, %p128
    %p131 = scmp.ne.s32.totalorder %s114, %s130
    %p132 = scmp.eq.s32.totalorder %s17, 0
    %p133 = por %p131, %p132
    %p134 = scmp.le.s32.totalorder 1, %s11
    %p135 = scmp.lt.s32.totalorder %s11, 3
    %p136 = pnand %p134, %p135
    %p137 = pneg %p136
    // Predicated region
    $region9: #{upsampler_forward.2} parent=5 // pred_check
      _
    $region10: #{upsampler_forward.2} parent=5 // pred_check_branch
      %139 = sbr.rel (%p136) target = $region12
    $region11: #{upsampler_forward.2} parent=5 // pred_region
      %s140 = ssub.s32 %s11, 1
      // Predicated region
      $region13: #{upsampler_forward.2} parent=11 // pred_check
        %p141 = pneg %p58
      $region14: #{upsampler_forward.2} parent=11 // pred_check_branch
        %143 = sbr.rel (%p141) target = $region16
      $region15: #{upsampler_forward.2} parent=11 // pred_region
        _
      $region16: #{upsampler_forward.2} parent=11 // pred_fallthru
        _
      // Predicated region
      $region17: #{upsampler_forward.2} parent=11 // pred_check
        %p144 = pneg %p79
      $region18: #{upsampler_forward.2} parent=11 // pred_check_branch
        %146 = sbr.rel (%p144) target = $region20
      $region19: #{upsampler_forward.2} parent=11 // pred_region
        _
      $region20: #{upsampler_forward.2} parent=11 // pred_fallthru
        _
      // Predicated region
      $region21: #{upsampler_forward.2} parent=11 // pred_check
        %p147 = pneg %p100
      $region22: #{upsampler_forward.2} parent=11 // pred_check_branch
        %149 = sbr.rel (%p147) target = $region24
      $region23: #{upsampler_forward.2} parent=11 // pred_region
        _
      $region24: #{upsampler_forward.2} parent=11 // pred_fallthru
        _
    $region12: #{upsampler_forward.2} parent=5 // pred_fallthru
      _
    %p150 = scmp.lt.s32.totalorder %s11, 2
    // Predicated region
    $region25: #{upsampler_forward.2} parent=5 // pred_check
      %p151 = pneg %p150
    $region26: #{upsampler_forward.2} parent=5 // pred_check_branch
      %153 = sbr.rel (%p151) target = $region28
    $region27: #{upsampler_forward.2} parent=5 // pred_region
      // Predicated region
      $region29: #{upsampler_forward.2} parent=27 // pred_check
        %p154 = pneg %p31
      $region30: #{upsampler_forward.2} parent=27 // pred_check_branch
        %156 = sbr.rel (%p154) target = $region32
      $region31: #{upsampler_forward.2} parent=27 // pred_region
        %p157 = scmp.lt.s32.totalorder %s11, 1
        %s158 = scalar_select %p157, %s11, 1
        %s159 = smul.addr %s158, 3
        %s160 = smul.addr %s159, 2
        %s161 = scalar_lea.vmem %s0, %s160
      $region32: #{upsampler_forward.2} parent=27 // pred_fallthru
        _
    $region28: #{upsampler_forward.2} parent=5 // pred_fallthru
      _
    %p162 = scmp.le.s32.totalorder 1, %s11
    %p163 = scmp.lt.s32.totalorder %s11, 3
    %p164 = pnand %p162, %p163
    %p165 = pneg %p164
    // Predicated region
    $region33: #{upsampler_forward.2} parent=5 // pred_check
      _
    $region34: #{upsampler_forward.2} parent=5 // pred_check_branch
      %167 = sbr.rel (%p164) target = $region36
    $region35: #{upsampler_forward.2} parent=5 // pred_region
      %s168 = ssub.s32 %s11, 1
      %p169 = scmp.lt.s32.totalorder %s16, 1
      %s170 = scalar_select %p169, %s16, 1
      %s171 = smul.addr %s170, 3
      %s172 = smul.addr %s171, 2
      %s173 = scalar_lea.vmem %s0, %s172
      %p174 = pneg %p37
      %p175 = pneg %p34
      %p176 = pneg %p58
      %p177 = pneg %p55
      %p178 = pneg %p79
      %p179 = pneg %p76
      %p180 = pneg %p100
      %p181 = pneg %p97
      %p182 = pneg %p126
      %p183 = pneg %p123
      %p184 = scmp.lt.s32.totalorder %s16, 1
      %s185 = scalar_select %p184, %s16, 1
      %s186 = smul.addr %s185, 4
      %s187 = smul.addr %s186, 4
      %s188 = scalar_lea.vmem %s4, %s187
      %p189 = scmp.lt.s32.totalorder %s16, 1
      %s190 = scalar_select %p189, %s16, 1
      %s191 = smul.addr %s190, 3
      %s192 = smul.addr %s191, 2
      %s193 = scalar_lea.vmem %s0, %s192
      %p194 = scmp.lt.s32.totalorder %s16, 1
      %s195 = scalar_select %p194, %s16, 1
      %s196 = smul.addr %s195, 4
      %s197 = smul.addr %s196, 4
      %s198 = scalar_lea.vmem %s4, %s197
      %v200 = vld [vmem:[%s193] sm:$0x3f]
      %v201 = vunpack.c.l.bf16 %v200
      %v202 = vunpack.c.h.bf16 %v200
      %v203 = vlaneseq
      %v204 = vand.u32 %v203, 127
      %v205 = vadd.s32 %v204, 128
      %vm206 = vcmp.lt.s32.totalorder %v204, 0
      %v207 = vsub.s32 0, %v204
      %v208 = vsel %vm206, %v207, %v204
      %v209 = vshrl.u32 %v208, 4
      %v210 = vand.u32 %v208, 15
      %v211 = vsub.s32 0, %v210
      %v212 = vsel %vm206, %v211, %v210
      %vm213 = vcmp.lt.s32.totalorder %v205, 0
      %v214 = vsub.s32 0, %v205
      %v215 = vsel %vm213, %v214, %v205
      %v216 = vshrl.u32 %v215, 4
      %v217 = vand.u32 %v215, 15
      %v218 = vsub.s32 0, %v217
      %v219 = vsel %vm213, %v218, %v217
      %vm220 = vcmp.ne.s32.totalorder %v212, 0
      %vm221 = vcmp.ne.s32.totalorder %v219, 0
      %vm222 = vcmp.lt.s32.totalorder %v212, 0
      %vm223 = vcmp.lt.s32.totalorder %v219, 0
      %vm224 = vmand %vm222, %vm220
      %vm225 = vmand %vm223, %vm221
      %v226 = vadd.s32 %v212, 16
      %v227 = vadd.s32 %v219, 16
      %v228 = vsel %vm224, %v226, %v212
      %v229 = vsel %vm225, %v227, %v219
      %v230 = vadd.s32 %v228, 4294967295
      %v231 = vadd.s32 %v229, 4294967295
      %vm232 = vcmp.ge.s32.totalorder %v230, 0
      %vm233 = vcmp.ge.s32.totalorder %v231, 0
      %vm234 = vcmp.lt.s32.totalorder %v230, 16
      %vm235 = vcmp.lt.s32.totalorder %v231, 16
      %vm236 = vmand %vm232, %vm234
      %vm237 = vmand %vm233, %vm235
      %v238 = vsel %vm236, 1, 0
      %v239 = vsel %vm237, 1, 0
      %vm240 = vcmp.eq.s32.totalorder %v238, 1
      %vm241 = vcmp.eq.s32.totalorder %v239, 1
      %243 = vst [vmem:[#allocation1] ss:$2 sm:$0xff] %v201
      %v244 = vld.sshfl [vmem:[#allocation1] sm:$0xff pattern:$0x75316420]
      %v245 = vld.sshfl [vmem:[#allocation1 + $0x8] sm:$0xff pattern:$0x75316420]
      %v248 = vsel %vm240, %v244, 0.0
      %v249 = vsel %vm241, %v245, 0.0
      %v250 = vadd.s32 %v228, 1
      %v251 = vadd.s32 %v229, 1
      %vm252 = vcmp.ge.s32.totalorder %v250, 0
      %vm253 = vcmp.ge.s32.totalorder %v251, 0
      %vm254 = vcmp.lt.s32.totalorder %v250, 16
      %vm255 = vcmp.lt.s32.totalorder %v251, 16
      %vm256 = vmand %vm252, %vm254
      %vm257 = vmand %vm253, %vm255
      %v258 = vsel %vm256, 1, 0
      %v259 = vsel %vm257, 1, 0
      %vm260 = vcmp.eq.s32.totalorder %v258, 1
      %vm261 = vcmp.eq.s32.totalorder %v259, 1
      %263 = vst [vmem:[#allocation1] ss:$2 sm:$0xff] %v201
      %s264 = scalar_lea.vmem [#allocation1], 16
      %265 = vst [vmem:[%s264] ss:$2 sm:$0xff] %v202
      %v266 = vld.sshfl [vmem:[#allocation1] sm:$0xff pattern:$0x75316420]
      %v267 = vld.sshfl [vmem:[#allocation1 + $0x8] sm:$0xff pattern:$0x75316420]
      %v268 = vld.sshfl [vmem:[#allocation1 + $0x10] sm:$0xff pattern:$0x75316420]
      %269 = vrot.lane.b32.xlu0 %v266, 126
      %v270 = vpop.permute.xlu0 %269
      %271 = vrot.lane.b32.xlu0 %v267, 126
      %v272 = vpop.permute.xlu0 %271
      %273 = vrot.lane.b32.xlu0 %v268, 126
      %v274 = vpop.permute.xlu0 %273
      %vm275 = vcmask 1031168
      %v276 = vsel %vm275, %v270, %v272
      %v277 = vsel %vm275, %v272, %v274
      %v280 = vsel %vm260, %v276, 0.0
      %v281 = vsel %vm261, %v277, 0.0
      %282 = vst [vmem:[#allocation1] ss:$2 sm:$0xff] %v201
      %s283 = scalar_lea.vmem [#allocation1], 16
      %284 = vst [vmem:[%s283] ss:$2 sm:$0xff] %v202
      %v285 = vld.sshfl [vmem:[#allocation1] sm:$0xff pattern:$0x75316420]
      %v286 = vld.sshfl [vmem:[#allocation1 + $0x8] sm:$0xff pattern:$0x75316420]
      %v287 = vld.sshfl [vmem:[#allocation1 + $0x10] sm:$0xff pattern:$0x75316420]
      %288 = vrot.lane.b32.xlu0 %v285, 112
      %v289 = vpop.permute.xlu0 %288
      %290 = vrot.lane.b32.xlu0 %v286, 112
      %v291 = vpop.permute.xlu0 %290
      %292 = vrot.lane.b32.xlu0 %v287, 112
      %v293 = vpop.permute.xlu0 %292
      %vm294 = vcmask 916480
      %v295 = vsel %vm294, %v289, %v291
      %v296 = vsel %vm294, %v291, %v293
      %v299 = vsel %vm240, %v295, 0.0
      %v300 = vsel %vm241, %v296, 0.0
      %301 = vst [vmem:[#allocation1] ss:$2 sm:$0xff] %v201
      %s302 = scalar_lea.vmem [#allocation1], 16
      %303 = vst [vmem:[%s302] ss:$2 sm:$0xff] %v202
      %v304 = vld.sshfl [vmem:[#allocation1] sm:$0xff pattern:$0x75316420]
      %v305 = vld.sshfl [vmem:[#allocation1 + $0x8] sm:$0xff pattern:$0x75316420]
      %v306 = vld.sshfl [vmem:[#allocation1 + $0x10] sm:$0xff pattern:$0x75316420]
      %307 = vrot.lane.b32.xlu0 %v304, 110
      %v308 = vpop.permute.xlu0 %307
      %309 = vrot.lane.b32.xlu0 %v305, 110
      %v310 = vpop.permute.xlu0 %309
      %311 = vrot.lane.b32.xlu0 %v306, 110
      %v312 = vpop.permute.xlu0 %311
      %vm313 = vcmask 900096
      %v314 = vsel %vm313, %v308, %v310
      %v315 = vsel %vm313, %v310, %v312
      %v318 = vsel %vm260, %v314, 0.0
      %v319 = vsel %vm261, %v315, 0.0
      %320 = vst [vmem:[#allocation1] ss:$2 sm:$0xff] %v201
      %s321 = scalar_lea.vmem [#allocation1], 16
      %322 = vst [vmem:[%s321] ss:$2 sm:$0xff] %v202
      %v323 = vld.sshfl [vmem:[#allocation1] sm:$0xff pattern:$0x75316420]
      %v324 = vld.sshfl [vmem:[#allocation1 + $0x8] sm:$0xff pattern:$0x75316420]
      %v325 = vld.sshfl [vmem:[#allocation1 + $0x10] sm:$0xff pattern:$0x75316420]
      %326 = vrot.lane.b32.xlu0 %v323, 96
      %v327 = vpop.permute.xlu0 %326
      %328 = vrot.lane.b32.xlu0 %v324, 96
      %v329 = vpop.permute.xlu0 %328
      %330 = vrot.lane.b32.xlu0 %v325, 96
      %v331 = vpop.permute.xlu0 %330
      %vm332 = vcmask 785408
      %v333 = vsel %vm332, %v327, %v329
      %v334 = vsel %vm332, %v329, %v331
      %v337 = vsel %vm240, %v333, 0.0
      %v338 = vsel %vm241, %v334, 0.0
      %339 = vst [vmem:[#allocation1] ss:$2 sm:$0xff] %v201
      %s340 = scalar_lea.vmem [#allocation1], 16
      %341 = vst [vmem:[%s340] ss:$2 sm:$0xff] %v202
      %v342 = vld.sshfl [vmem:[#allocation1] sm:$0xff pattern:$0x75316420]
      %v343 = vld.sshfl [vmem:[#allocation1 + $0x8] sm:$0xff pattern:$0x75316420]
      %v344 = vld.sshfl [vmem:[#allocation1 + $0x10] sm:$0xff pattern:$0x75316420]
      %345 = vrot.lane.b32.xlu0 %v342, 94
      %v346 = vpop.permute.xlu0 %345
      %347 = vrot.lane.b32.xlu0 %v343, 94
      %v348 = vpop.permute.xlu0 %347
      %349 = vrot.lane.b32.xlu0 %v344, 94
      %v350 = vpop.permute.xlu0 %349
      %vm351 = vcmask 769024
      %v352 = vsel %vm351, %v346, %v348
      %v353 = vsel %vm351, %v348, %v350
      %v356 = vsel %vm260, %v352, 0.0
      %v357 = vsel %vm261, %v353, 0.0
      %s358 = scalar_lea.vmem [#allocation1], 1
      %359 = vst [vmem:[%s358] ss:$2 sm:$0xff] %v201
      %s360 = scalar_lea.vmem [#allocation1], 17
      %361 = vst [vmem:[%s360] ss:$2 sm:$0xff] %v202
      %v362 = vld.sshfl [vmem:[#allocation1] sm:$0xff pattern:$0x75316420]
      %v363 = vld.sshfl [vmem:[#allocation1 + $0x8] sm:$0xff pattern:$0x75316420]
      %v364 = vld.sshfl [vmem:[#allocation1 + $0x10] sm:$0xff pattern:$0x75316420]
      %365 = vrot.lane.b32.xlu0 %v362, 127
      %v366 = vpop.permute.xlu0 %365
      %367 = vrot.lane.b32.xlu0 %v363, 127
      %v368 = vpop.permute.xlu0 %367
      %369 = vrot.lane.b32.xlu0 %v364, 127
      %v370 = vpop.permute.xlu0 %369
      %vm371 = vcmask 1039360
      %v372 = vsel %vm371, %v366, %v368
      %v373 = vsel %vm371, %v368, %v370
      %v378 = vrot.slane %v299, 4
      %v379 = vrot.slane %v300, 4
      %382 = vst [vmem:[#allocation1] ss:$2 sm:$0xff] %v201
      %s383 = scalar_lea.vmem [#allocation1], 16
      %384 = vst [vmem:[%s383] ss:$2 sm:$0xff] %v202
      %v385 = vld.sshfl [vmem:[#allocation1] sm:$0xff pattern:$0x75316420]
      %v386 = vld.sshfl [vmem:[#allocation1 + $0x8] sm:$0xff pattern:$0x75316420]
      %v387 = vld.sshfl [vmem:[#allocation1 + $0x10] sm:$0xff pattern:$0x75316420]
      %388 = vrot.lane.b32.xlu0 %v385, 111
      %v389 = vpop.permute.xlu0 %388
      %390 = vrot.lane.b32.xlu0 %v386, 111
      %v391 = vpop.permute.xlu0 %390
      %392 = vrot.lane.b32.xlu0 %v387, 111
      %v393 = vpop.permute.xlu0 %392
      %vm394 = vcmask 908288
      %v395 = vsel %vm394, %v389, %v391
      %v396 = vsel %vm394, %v391, %v393
      %v401 = vrot.slane %v318, 4
      %v402 = vrot.slane %v319, 4
      %s405 = scalar_lea.vmem [#allocation1], 1
      %406 = vst [vmem:[%s405] ss:$2 sm:$0xff] %v201
      %s407 = scalar_lea.vmem [#allocation1], 17
      %408 = vst [vmem:[%s407] ss:$2 sm:$0xff] %v202
      %v409 = vld.sshfl [vmem:[#allocation1] sm:$0xff pattern:$0x75316420]
      %v410 = vld.sshfl [vmem:[#allocation1 + $0x8] sm:$0xff pattern:$0x75316420]
      %v411 = vld.sshfl [vmem:[#allocation1 + $0x10] sm:$0xff pattern:$0x75316420]
      %412 = vrot.lane.b32.xlu0 %v409, 95
      %v413 = vpop.permute.xlu0 %412
      %414 = vrot.lane.b32.xlu0 %v410, 95
      %v415 = vpop.permute.xlu0 %414
      %416 = vrot.lane.b32.xlu0 %v411, 95
      %v417 = vpop.permute.xlu0 %416
      %vm418 = vcmask 777216
      %v419 = vsel %vm418, %v413, %v415
      %v420 = vsel %vm418, %v415, %v417
      %vm423 = vcmask 1043456
      %v424 = vsel %vm423, %v248, %v372
      %v425 = vsel %vm423, %v249, %v373
      %v426 = vsel %vm423, %v280, %v378
      %v427 = vsel %vm423, %v281, %v379
      %v428 = vsel %vm423, %v395, %v401
      %v429 = vsel %vm423, %v396, %v402
      %v430 = vsel %vm423, %v337, %v419
      %v431 = vsel %vm423, %v338, %v420
      %v432 = vpack.c.bf16 %v426, %v424
      %v433 = vpack.c.bf16 %v427, %v425
      %v434 = vpack.c.bf16 %v430, %v428
      %v435 = vpack.c.bf16 %v431, %v429
      %v436 = vpack.c.bf16 %v356, %v356
      %v437 = vpack.c.bf16 %v357, %v357
      %v438 = vld [vmem:[%s1] sm:$0xf]
      %v439 = vld [vmem:[%s1 + $0x4] sm:$0xf]
      %v440 = vld [vmem:[%s2] sm:$0xff]
      %v441 = vld [vmem:[%s2 + $0x8] sm:$0xff]
      %443 = vset.pattern.permute.xlu0 0
      %444 = vperm.xlu0 %443, %v440
      %v445 = vpop.permute.xlu0 %444
      %448 = vset.pattern.permute.xlu0 0
      %449 = vperm.xlu0 %448, %v441
      %v450 = vpop.permute.xlu0 %449
      %v454 = vunpack.c.l.b16 %v438
      %v455 = vunpack.c.l.b16 %v439
      %v456 = vpack.c.b16 %v455, %v454
      %vm457 = vcmask 293888
      %v459 = vsel %vm457, %v456, 0
      %vm461 = vcmask 1041408
      %v463 = vsel %vm461, %v436, 0
      %v466 = vsel %vm461, %v437, 0
      %468 = vmatpush.bf16.msra.mxu0 0
      %469 = vmatpush.bf16.msra.mxu0 0
      %470 = vmatpush.bf16.msra.mxu0 0
      %471 = vmatpush.bf16.msra.mxu0 0
      %472 = vmatpush.bf16.msra.mxu0 0
      %473 = vmatpush.bf16.msra.mxu0 %v463
      %474 = vmatpush.bf16.msra.mxu0 %v434
      %475 = vmatpush.bf16.msra.mxu0 %v432
      %476 = vmatmul.bf16.gmra.mxu0 %v459
      %v477 = vpop.f32.mrf.mxu0
      %v478 = vadd.f32 %v445, %v477
      %v479 = vpop.f32.mrf.mxu0
      %v480 = vadd.f32 %v450, %v479
      %481 = vdwg.mxu0
      %482 = vmatpush.bf16.msra.mxu0 0
      %483 = vmatpush.bf16.msra.mxu0 0
      %484 = vmatpush.bf16.msra.mxu0 0
      %485 = vmatpush.bf16.msra.mxu0 0
      %486 = vmatpush.bf16.msra.mxu0 0
      %487 = vmatpush.bf16.msra.mxu0 %v466
      %488 = vmatpush.bf16.msra.mxu0 %v435
      %489 = vmatpush.bf16.msra.mxu0 %v433
      %490 = vmatmul.bf16.gmra.mxu0 %v459
      %v491 = vpop.f32.mrf.mxu0
      %v492 = vadd.f32 %v445, %v491
      %v493 = vpop.f32.mrf.mxu0
      %v494 = vadd.f32 %v450, %v493
      %495 = vdwg.mxu0
      %v496 = vpack.c.bf16 %v492, %v478
      %v497 = vpack.c.bf16 %v494, %v480
      %498 = vst [vmem:[%s198] sm:$0xff] %v496
      %499 = vst [vmem:[%s198 + $0x8] sm:$0xff] %v497
      %p500 = scmp.lt.s32.totalorder %s16, 1
      %s501 = scalar_select %p500, %s16, 1
      %s502 = smul.addr %s501, 4
      %s503 = smul.addr %s502, 4
      %s504 = scalar_lea.vmem %s4, %s503
      // Predicated region
      $region37: #{upsampler_forward.2} parent=35 // pred_check
        %p505 = pneg %p123
      $region38: #{upsampler_forward.2} parent=35 // pred_check_branch
        %507 = sbr.rel (%p505) target = $region40
      $region39: #{upsampler_forward.2} parent=35 // pred_region
        _
      $region40: #{upsampler_forward.2} parent=35 // pred_fallthru
        _
    $region36: #{upsampler_forward.2} parent=5 // pred_fallthru
      _
    %p508 = scmp.le.s32.totalorder 2, %s11
    // Predicated region
    $region41: #{upsampler_forward.2} parent=5 // pred_check
      %p509 = pneg %p508
    $region42: #{upsampler_forward.2} parent=5 // pred_check_branch
      %511 = sbr.rel (%p509) target = $region44
    $region43: #{upsampler_forward.2} parent=5 // pred_region
      %s512 = ssub.s32 %s11, 2
      // Predicated region
      $region45: #{upsampler_forward.2} parent=43 // pred_check
        %p513 = pneg %p129
      $region46: #{upsampler_forward.2} parent=43 // pred_check_branch
        %515 = sbr.rel (%p513) target = $region48
      $region47: #{upsampler_forward.2} parent=43 // pred_region
        %p516 = scmp.lt.s32.totalorder %s17, 1
        %s517 = scalar_select %p516, %s17, 1
        %s518 = smul.addr %s517, 4
        %s519 = smul.addr %s518, 4
        %s520 = scalar_lea.vmem %s4, %s519
      $region48: #{upsampler_forward.2} parent=43 // pred_fallthru
        _
    $region44: #{upsampler_forward.2} parent=5 // pred_fallthru
      _
  $region6: #{upsampler_forward.2} parent=0 // loop_footer
    %s15 = sadd.s32 1, %s11
  $region7: #{upsampler_forward.2} parent=0 // loop_footer_branch
    %10 = sbr.rel target = $region3
  $region8: #{upsampler_forward.2} parent=0 // loop_exit
    _

// kernel: upsampler_forward.3
$region0: #{upsampler_forward.3}
  #allocation0 [shape = 'u32[]', space=smem, size = 0x4, offset = 0x4, fixed_abs, tag = 'smem constant byte address 0x4 - core index']
  #allocation1 [shape = 'u32[72,128]{1,0:T(1,128)}', space=vmem, size = 0x9000, scoped, tag = 'internal scratch']
  #allocation2 [shape = 'f32[1,1]{1,0:T(1,128)S(6)}', space=smem, size = 0x200, scoped, tag = 'scoped memory for upsampler_forward.3']
  %s0 = inlined_call_operand.vmem [shape: bf16[2,4,1090], index: 0, kind: input, shape index: {}]
  %s1 = inlined_call_operand.vmem [shape: bf16[16,36], index: 1, kind: input, shape index: {}]
  %s2 = inlined_call_operand.vmem [shape: f32[16,1], index: 2, kind: input, shape index: {}]
  %s3 = inlined_call_operand.<no memory space> [shape: f32[1,1], index: 3, kind: input, shape index: {}]
  %s4 = inlined_call_operand.vmem [shape: f32[2,16,1024], index: 4, kind: output, shape index: {}]
  %s5 = sld [smem:[#allocation0]]
  $region49: #{upsampler_forward.3} parent=0
    _
  %s7 = ssub.s32 1, %s5
  %s8 = scalar_select 0, %s7, %s5
  %9 = sst [smem:[#allocation2]] %s3
  loop: start=0, step=1, limit=4
  $region2: #{upsampler_forward.3} parent=0 // loop_pre_header
    _
  $region3: #{upsampler_forward.3} parent=0 // loop_header
    %s11 = sphi 0, %s15
    %p12 = scmp.ge.s32.totalorder %s11, 4
    %s21 = sphi 0, %s23
    %s24 = sphi 0, %s21
    %s25 = sphi 0, %s24
    %s41 = sphi 0, %s25
    %s45 = sphi 0, %s45
    %s47 = sphi 0, %s45
    %s48 = sphi 0, %s47
    %s62 = sphi 0, %s48
    %s66 = sphi 0, %s66
    %s68 = sphi 0, %s66
    %s69 = sphi 0, %s68
    %s83 = sphi 0, %s69
    %s87 = sphi 0, %s87
    %s89 = sphi 0, %s87
    %s90 = sphi 0, %s89
    %s104 = sphi 0, %s90
    %s110 = sphi 0, %s112
    %s113 = sphi 0, %s110
    %s114 = sphi 0, %s113
    %s130 = sphi 0, %s114
  $region4: #{upsampler_forward.3} parent=0 // loop_header_branch
    %14 = sbr.rel (%p12) target = $region8
  $region5: #{upsampler_forward.3} parent=0 // loop_body
    %s16 = ssub.s32 %s11, 1
    %s17 = ssub.s32 %s11, 2
    %s18 = sadd.s32 %s11, 1
    %s19 = ssub.s32 %s11, %s18
    %p20 = scmp.eq.s32.totalorder %s19, 0
    %s22 = sadd.s32 %s21, 1
    %s23 = scalar_select %p20, %s21, %s22
    %p26 = pneg %p20
    %p27 = scmp.eq.s32.totalorder %s11, 1
    %p28 = por %p26, %p27
    %p29 = scmp.ne.s32.totalorder %s21, %s24
    %p30 = scmp.eq.s32.totalorder %s11, 0
    %p31 = por %p29, %p30
    %p32 = scmp.ne.s32.totalorder %s21, %s24
    %p33 = scmp.eq.s32.totalorder %s16, 1
    %p34 = por %p32, %p33
    %p35 = scmp.ne.s32.totalorder %s24, %s25
    %p36 = scmp.eq.s32.totalorder %s16, 0
    %p37 = por %p35, %p36
    %p38 = scmp.ne.s32.totalorder %s24, %s25
    %p39 = scmp.eq.s32.totalorder %s17, 1
    %p40 = por %p38, %p39
    %p42 = scmp.ne.s32.totalorder %s25, %s41
    %p43 = scmp.eq.s32.totalorder %s17, 0
    %p44 = por %p42, %p43
    %s46 = sadd.s32 %s45, 1
    %p49 = scmp.eq.s32.totalorder %s11, 1
    %p50 = scmp.ne.s32.totalorder %s45, %s47
    %p51 = scmp.eq.s32.totalorder %s11, 0
    %p52 = por %p50, %p51
    %p53 = scmp.ne.s32.totalorder %s45, %s47
    %p54 = scmp.eq.s32.totalorder %s16, 1
    %p55 = por %p53, %p54
    %p56 = scmp.ne.s32.totalorder %s47, %s48
    %p57 = scmp.eq.s32.totalorder %s16, 0
    %p58 = por %p56, %p57
    %p59 = scmp.ne.s32.totalorder %s47, %s48
    %p60 = scmp.eq.s32.totalorder %s17, 1
    %p61 = por %p59, %p60
    %p63 = scmp.ne.s32.totalorder %s48, %s62
    %p64 = scmp.eq.s32.totalorder %s17, 0
    %p65 = por %p63, %p64
    %s67 = sadd.s32 %s66, 1
    %p70 = scmp.eq.s32.totalorder %s11, 1
    %p71 = scmp.ne.s32.totalorder %s66, %s68
    %p72 = scmp.eq.s32.totalorder %s11, 0
    %p73 = por %p71, %p72
    %p74 = scmp.ne.s32.totalorder %s66, %s68
    %p75 = scmp.eq.s32.totalorder %s16, 1
    %p76 = por %p74, %p75
    %p77 = scmp.ne.s32.totalorder %s68, %s69
    %p78 = scmp.eq.s32.totalorder %s16, 0
    %p79 = por %p77, %p78
    %p80 = scmp.ne.s32.totalorder %s68, %s69
    %p81 = scmp.eq.s32.totalorder %s17, 1
    %p82 = por %p80, %p81
    %p84 = scmp.ne.s32.totalorder %s69, %s83
    %p85 = scmp.eq.s32.totalorder %s17, 0
    %p86 = por %p84, %p85
    %s88 = sadd.s32 %s87, 1
    %p91 = scmp.eq.s32.totalorder %s11, 1
    %p92 = scmp.ne.s32.totalorder %s87, %s89
    %p93 = scmp.eq.s32.totalorder %s11, 0
    %p94 = por %p92, %p93
    %p95 = scmp.ne.s32.totalorder %s87, %s89
    %p96 = scmp.eq.s32.totalorder %s16, 1
    %p97 = por %p95, %p96
    %p98 = scmp.ne.s32.totalorder %s89, %s90
    %p99 = scmp.eq.s32.totalorder %s16, 0
    %p100 = por %p98, %p99
    %p101 = scmp.ne.s32.totalorder %s89, %s90
    %p102 = scmp.eq.s32.totalorder %s17, 1
    %p103 = por %p101, %p102
    %p105 = scmp.ne.s32.totalorder %s90, %s104
    %p106 = scmp.eq.s32.totalorder %s17, 0
    %p107 = por %p105, %p106
    %s108 = ssub.s32 %s11, %s18
    %p109 = scmp.eq.s32.totalorder %s108, 0
    %s111 = sadd.s32 %s110, 1
    %s112 = scalar_select %p109, %s110, %s111
    %p115 = pneg %p109
    %p116 = scmp.eq.s32.totalorder %s11, 1
    %p117 = por %p115, %p116
    %p118 = scmp.ne.s32.totalorder %s110, %s113
    %p119 = scmp.eq.s32.totalorder %s11, 0
    %p120 = por %p118, %p119
    %p121 = scmp.ne.s32.totalorder %s110, %s113
    %p122 = scmp.eq.s32.totalorder %s16, 1
    %p123 = por %p121, %p122
    %p124 = scmp.ne.s32.totalorder %s113, %s114
    %p125 = scmp.eq.s32.totalorder %s16, 0
    %p126 = por %p124, %p125
    %p127 = scmp.ne.s32.totalorder %s113, %s114
    %p128 = scmp.eq.s32.totalorder %s17, 1
    %p129 = por %p127, %p128
    %p131 = scmp.ne.s32.totalorder %s114, %s130
    %p132 = scmp.eq.s32.totalorder %s17, 0
    %p133 = por %p131, %p132
    %p134 = scmp.le.s32.totalorder 1, %s11
    %p135 = scmp.lt.s32.totalorder %s11, 3
    %p136 = pnand %p134, %p135
    %p137 = pneg %p136
    // Predicated region
    $region9: #{upsampler_forward.3} parent=5 // pred_check
      _
    $region10: #{upsampler_forward.3} parent=5 // pred_check_branch
      %139 = sbr.rel (%p136) target = $region12
    $region11: #{upsampler_forward.3} parent=5 // pred_region
      %s140 = ssub.s32 %s11, 1
      // Predicated region
      $region13: #{upsampler_forward.3} parent=11 // pred_check
        %p141 = pneg %p58
      $region14: #{upsampler_forward.3} parent=11 // pred_check_branch
        %143 = sbr.rel (%p141) target = $region16
      $region15: #{upsampler_forward.3} parent=11 // pred_region
        _
      $region16: #{upsampler_forward.3} parent=11 // pred_fallthru
        _
      // Predicated region
      $region17: #{upsampler_forward.3} parent=11 // pred_check
        %p144 = pneg %p79
      $region18: #{upsampler_forward.3} parent=11 // pred_check_branch
        %146 = sbr.rel (%p144) target = $region20
      $region19: #{upsampler_forward.3} parent=11 // pred_region
        _
      $region20: #{upsampler_forward.3} parent=11 // pred_fallthru
        _
      // Predicated region
      $region21: #{upsampler_forward.3} parent=11 // pred_check
        %p147 = pneg %p100
      $region22: #{upsampler_forward.3} parent=11 // pred_check_branch
        %149 = sbr.rel (%p147) target = $region24
      $region23: #{upsampler_forward.3} parent=11 // pred_region
        _
      $region24: #{upsampler_forward.3} parent=11 // pred_fallthru
        _
    $region12: #{upsampler_forward.3} parent=5 // pred_fallthru
      _
    %p150 = scmp.lt.s32.totalorder %s11, 2
    // Predicated region
    $region25: #{upsampler_forward.3} parent=5 // pred_check
      %p151 = pneg %p150
    $region26: #{upsampler_forward.3} parent=5 // pred_check_branch
      %153 = sbr.rel (%p151) target = $region28
    $region27: #{upsampler_forward.3} parent=5 // pred_region
      // Predicated region
      $region29: #{upsampler_forward.3} parent=27 // pred_check
        %p154 = pneg %p31
      $region30: #{upsampler_forward.3} parent=27 // pred_check_branch
        %156 = sbr.rel (%p154) target = $region32
      $region31: #{upsampler_forward.3} parent=27 // pred_region
        %p157 = scmp.lt.s32.totalorder %s11, 1
        %s158 = scalar_select %p157, %s11, 1
        %s159 = smul.addr %s158, 9
        %s160 = smul.addr %s159, 2
        %s161 = scalar_lea.vmem %s0, %s160
      $region32: #{upsampler_forward.3} parent=27 // pred_fallthru
        _
    $region28: #{upsampler_forward.3} parent=5 // pred_fallthru
      _
    %p162 = scmp.le.s32.totalorder 1, %s11
    %p163 = scmp.lt.s32.totalorder %s11, 3
    %p164 = pnand %p162, %p163
    %p165 = pneg %p164
    // Predicated region
    $region33: #{upsampler_forward.3} parent=5 // pred_check
      _
    $region34: #{upsampler_forward.3} parent=5 // pred_check_branch
      %167 = sbr.rel (%p164) target = $region36
    $region35: #{upsampler_forward.3} parent=5 // pred_region
      %s168 = ssub.s32 %s11, 1
      %p169 = scmp.lt.s32.totalorder %s16, 1
      %s170 = scalar_select %p169, %s16, 1
      %s171 = smul.addr %s170, 9
      %s172 = smul.addr %s171, 2
      %s173 = scalar_lea.vmem %s0, %s172
      %p174 = pneg %p37
      %p175 = pneg %p34
      %p176 = pneg %p58
      %p177 = pneg %p55
      %p178 = pneg %p79
      %p179 = pneg %p76
      %p180 = pneg %p100
      %p181 = pneg %p97
      %p182 = pneg %p126
      %p183 = pneg %p123
      %p184 = scmp.lt.s32.totalorder %s16, 1
      %s185 = scalar_select %p184, %s16, 1
      %s186 = smul.addr %s185, 16
      %s187 = smul.addr %s186, 8
      %s188 = scalar_lea.vmem %s4, %s187
      %p189 = scmp.lt.s32.totalorder %s16, 1
      %s190 = scalar_select %p189, %s16, 1
      %s191 = smul.addr %s190, 9
      %s192 = smul.addr %s191, 2
      %s193 = scalar_lea.vmem %s0, %s192
      %p194 = scmp.lt.s32.totalorder %s16, 1
      %s195 = scalar_select %p194, %s16, 1
      %s196 = smul.addr %s195, 16
      %s197 = smul.addr %s196, 8
      %s198 = scalar_lea.vmem %s4, %s197
      %v200 = vld [vmem:[%s193] sm:$0xff]
      %v201 = vld [vmem:[%s193 + $0x8] sm:$0xff]
      %v202 = vld [vmem:[%s193 + $0x10] sm:$0x3]
      %v203 = vunpack.c.l.bf16 %v200
      %v204 = vunpack.c.h.bf16 %v200
      %v205 = vunpack.c.l.bf16 %v201
      %v206 = vunpack.c.h.bf16 %v201
      %v207 = vunpack.c.l.bf16 %v202
      %v208 = vlaneseq
      %v209 = vand.u32 %v208, 127
      %v210 = vadd.s32 %v209, 128
      %v211 = vadd.s32 %v209, 256
      %v212 = vadd.s32 %v209, 384
      %v213 = vadd.s32 %v209, 512
      %v214 = vadd.s32 %v209, 640
      %v215 = vadd.s32 %v209, 768
      %v216 = vadd.s32 %v209, 896
      %vm217 = vcmp.lt.s32.totalorder %v209, 0
      %v218 = vsub.s32 0, %v209
      %v219 = vsel %vm217, %v218, %v209
      %v220 = vshrl.u32 %v219, 5
      %v221 = vand.u32 %v219, 31
      %v222 = vsub.s32 0, %v221
      %v223 = vsel %vm217, %v222, %v221
      %vm224 = vcmp.lt.s32.totalorder %v210, 0
      %v225 = vsub.s32 0, %v210
      %v226 = vsel %vm224, %v225, %v210
      %v227 = vshrl.u32 %v226, 5
      %v228 = vand.u32 %v226, 31
      %v229 = vsub.s32 0, %v228
      %v230 = vsel %vm224, %v229, %v228
      %vm231 = vcmp.lt.s32.totalorder %v211, 0
      %v232 = vsub.s32 0, %v211
      %v233 = vsel %vm231, %v232, %v211
      %v234 = vshrl.u32 %v233, 5
      %v235 = vand.u32 %v233, 31
      %v236 = vsub.s32 0, %v235
      %v237 = vsel %vm231, %v236, %v235
      %vm238 = vcmp.lt.s32.totalorder %v212, 0
      %v239 = vsub.s32 0, %v212
      %v240 = vsel %vm238, %v239, %v212
      %v241 = vshrl.u32 %v240, 5
      %v242 = vand.u32 %v240, 31
      %v243 = vsub.s32 0, %v242
      %v244 = vsel %vm238, %v243, %v242
      %vm245 = vcmp.lt.s32.totalorder %v213, 0
      %v246 = vsub.s32 0, %v213
      %v247 = vsel %vm245, %v246, %v213
      %v248 = vshrl.u32 %v247, 5
      %v249 = vand.u32 %v247, 31
      %v250 = vsub.s32 0, %v249
      %v251 = vsel %vm245, %v250, %v249
      %vm252 = vcmp.lt.s32.totalorder %v214, 0
      %v253 = vsub.s32 0, %v214
      %v254 = vsel %vm252, %v253, %v214
      %v255 = vshrl.u32 %v254, 5
      %v256 = vand.u32 %v254, 31
      %v257 = vsub.s32 0, %v256
      %v258 = vsel %vm252, %v257, %v256
      %vm259 = vcmp.lt.s32.totalorder %v215, 0
      %v260 = vsub.s32 0, %v215
      %v261 = vsel %vm259, %v260, %v215
      %v262 = vshrl.u32 %v261, 5
      %v263 = vand.u32 %v261, 31
      %v264 = vsub.s32 0, %v263
      %v265 = vsel %vm259, %v264, %v263
      %vm266 = vcmp.lt.s32.totalorder %v216, 0
      %v267 = vsub.s32 0, %v216
      %v268 = vsel %vm266, %v267, %v216
      %v269 = vshrl.u32 %v268, 5
      %v270 = vand.u32 %v268, 31
      %v271 = vsub.s32 0, %v270
      %v272 = vsel %vm266, %v271, %v270
      %vm273 = vcmp.ne.s32.totalorder %v223, 0
      %vm274 = vcmp.ne.s32.totalorder %v230, 0
      %vm275 = vcmp.ne.s32.totalorder %v237, 0
      %vm276 = vcmp.ne.s32.totalorder %v244, 0
      %vm277 = vcmp.ne.s32.totalorder %v251, 0
      %vm278 = vcmp.ne.s32.totalorder %v258, 0
      %vm279 = vcmp.ne.s32.totalorder %v265, 0
      %vm280 = vcmp.ne.s32.totalorder %v272, 0
      %vm281 = vcmp.lt.s32.totalorder %v223, 0
      %vm282 = vcmp.lt.s32.totalorder %v230, 0
      %vm283 = vcmp.lt.s32.totalorder %v237, 0
      %vm284 = vcmp.lt.s32.totalorder %v244, 0
      %vm285 = vcmp.lt.s32.totalorder %v251, 0
      %vm286 = vcmp.lt.s32.totalorder %v258, 0
      %vm287 = vcmp.lt.s32.totalorder %v265, 0
      %vm288 = vcmp.lt.s32.totalorder %v272, 0
      %vm289 = vmand %vm281, %vm273
      %vm290 = vmand %vm282, %vm274
      %vm291 = vmand %vm283, %vm275
      %vm292 = vmand %vm284, %vm276
      %vm293 = vmand %vm285, %vm277
      %vm294 = vmand %vm286, %vm278
      %vm295 = vmand %vm287, %vm279
      %vm296 = vmand %vm288, %vm280
      %v297 = vadd.s32 %v223, 32
      %v298 = vadd.s32 %v230, 32
      %v299 = vadd.s32 %v237, 32
      %v300 = vadd.s32 %v244, 32
      %v301 = vadd.s32 %v251, 32
      %v302 = vadd.s32 %v258, 32
      %v303 = vadd.s32 %v265, 32
      %v304 = vadd.s32 %v272, 32
      %v305 = vsel %vm289, %v297, %v223
      %v306 = vsel %vm290, %v298, %v230
      %v307 = vsel %vm291, %v299, %v237
      %v308 = vsel %vm292, %v300, %v244
      %v309 = vsel %vm293, %v301, %v251
      %v310 = vsel %vm294, %v302, %v258
      %v311 = vsel %vm295, %v303, %v265
      %v312 = vsel %vm296, %v304, %v272
      %v313 = vadd.s32 %v305, 4294967295
      %v314 = vadd.s32 %v306, 4294967295
      %v315 = vadd.s32 %v307, 4294967295
      %v316 = vadd.s32 %v308, 4294967295
      %v317 = vadd.s32 %v309, 4294967295
      %v318 = vadd.s32 %v310, 4294967295
      %v319 = vadd.s32 %v311, 4294967295
      %v320 = vadd.s32 %v312, 4294967295
      %vm321 = vcmp.ge.s32.totalorder %v313, 0
      %vm322 = vcmp.ge.s32.totalorder %v314, 0
      %vm323 = vcmp.ge.s32.totalorder %v315, 0
      %vm324 = vcmp.ge.s32.totalorder %v316, 0
      %vm325 = vcmp.ge.s32.totalorder %v317, 0
      %vm326 = vcmp.ge.s32.totalorder %v318, 0
      %vm327 = vcmp.ge.s32.totalorder %v319, 0
      %vm328 = vcmp.ge.s32.totalorder %v320, 0
      %vm329 = vcmp.lt.s32.totalorder %v313, 32
      %vm330 = vcmp.lt.s32.totalorder %v314, 32
      %vm331 = vcmp.lt.s32.totalorder %v315, 32
      %vm332 = vcmp.lt.s32.totalorder %v316, 32
      %vm333 = vcmp.lt.s32.totalorder %v317, 32
      %vm334 = vcmp.lt.s32.totalorder %v318, 32
      %vm335 = vcmp.lt.s32.totalorder %v319, 32
      %vm336 = vcmp.lt.s32.totalorder %v320, 32
      %vm337 = vmand %vm321, %vm329
      %vm338 = vmand %vm322, %vm330
      %vm339 = vmand %vm323, %vm331
      %vm340 = vmand %vm324, %vm332
      %vm341 = vmand %vm325, %vm333
      %vm342 = vmand %vm326, %vm334
      %vm343 = vmand %vm327, %vm335
      %vm344 = vmand %vm328, %vm336
      %v345 = vsel %vm337, 1, 0
      %v346 = vsel %vm338, 1, 0
      %v347 = vsel %vm339, 1, 0
      %v348 = vsel %vm340, 1, 0
      %v349 = vsel %vm341, 1, 0
      %v350 = vsel %vm342, 1, 0
      %v351 = vsel %vm343, 1, 0
      %v352 = vsel %vm344, 1, 0
      %vm353 = vcmp.eq.s32.totalorder %v345, 1
      %vm354 = vcmp.eq.s32.totalorder %v346, 1
      %vm355 = vcmp.eq.s32.totalorder %v347, 1
      %vm356 = vcmp.eq.s32.totalorder %v348, 1
      %vm357 = vcmp.eq.s32.totalorder %v349, 1
      %vm358 = vcmp.eq.s32.totalorder %v350, 1
      %vm359 = vcmp.eq.s32.totalorder %v351, 1
      %vm360 = vcmp.eq.s32.totalorder %v352, 1
      %365 = vst [vmem:[#allocation1] ss:$2 sm:$0xff] %v203
      %s366 = scalar_lea.vmem [#allocation1], 16
      %367 = vst [vmem:[%s366] ss:$2 sm:$0xff] %v204
      %s368 = scalar_lea.vmem [#allocation1], 32
      %369 = vst [vmem:[%s368] ss:$2 sm:$0xff] %v205
      %s370 = scalar_lea.vmem [#allocation1], 48
      %371 = vst [vmem:[%s370] ss:$2 sm:$0xff] %v206
      %v372 = vld.sshfl [vmem:[#allocation1] sm:$0xff pattern:$0x75316420]
      %v373 = vld.sshfl [vmem:[#allocation1 + $0x8] sm:$0xff pattern:$0x75316420]
      %v374 = vld.sshfl [vmem:[#allocation1 + $0x10] sm:$0xff pattern:$0x75316420]
      %v375 = vld.sshfl [vmem:[#allocation1 + $0x18] sm:$0xff pattern:$0x75316420]
      %v376 = vld.sshfl [vmem:[#allocation1 + $0x20] sm:$0xff pattern:$0x75316420]
      %v377 = vld.sshfl [vmem:[#allocation1 + $0x28] sm:$0xff pattern:$0x75316420]
      %v378 = vld.sshfl [vmem:[#allocation1 + $0x30] sm:$0xff pattern:$0x75316420]
      %v379 = vld.sshfl [vmem:[#allocation1 + $0x38] sm:$0xff pattern:$0x75316420]
      %v388 = vsel %vm353, %v372, 0.0
      %v389 = vsel %vm354, %v373, 0.0
      %v390 = vsel %vm355, %v374, 0.0
      %v391 = vsel %vm356, %v375, 0.0
      %v392 = vsel %vm357, %v376, 0.0
      %v393 = vsel %vm358, %v377, 0.0
      %v394 = vsel %vm359, %v378, 0.0
      %v395 = vsel %vm360, %v379, 0.0
      %v396 = vadd.s32 %v305, 1
      %v397 = vadd.s32 %v306, 1
      %v398 = vadd.s32 %v307, 1
      %v399 = vadd.s32 %v308, 1
      %v400 = vadd.s32 %v309, 1
      %v401 = vadd.s32 %v310, 1
      %v402 = vadd.s32 %v311, 1
      %v403 = vadd.s32 %v312, 1
      %vm404 = vcmp.ge.s32.totalorder %v396, 0
      %vm405 = vcmp.ge.s32.totalorder %v397, 0
      %vm406 = vcmp.ge.s32.totalorder %v398, 0
      %vm407 = vcmp.ge.s32.totalorder %v399, 0
      %vm408 = vcmp.ge.s32.totalorder %v400, 0
      %vm409 = vcmp.ge.s32.totalorder %v401, 0
      %vm410 = vcmp.ge.s32.totalorder %v402, 0
      %vm411 = vcmp.ge.s32.totalorder %v403, 0
      %vm412 = vcmp.lt.s32.totalorder %v396, 32
      %vm413 = vcmp.lt.s32.totalorder %v397, 32
      %vm414 = vcmp.lt.s32.totalorder %v398, 32
      %vm415 = vcmp.lt.s32.totalorder %v399, 32
      %vm416 = vcmp.lt.s32.totalorder %v400, 32
      %vm417 = vcmp.lt.s32.totalorder %v401, 32
      %vm418 = vcmp.lt.s32.totalorder %v402, 32
      %vm419 = vcmp.lt.s32.totalorder %v403, 32
      %vm420 = vmand %vm404, %vm412
      %vm421 = vmand %vm405, %vm413
      %vm422 = vmand %vm406, %vm414
      %vm423 = vmand %vm407, %vm415
      %vm424 = vmand %vm408, %vm416
      %vm425 = vmand %vm409, %vm417
      %vm426 = vmand %vm410, %vm418
      %vm427 = vmand %vm411, %vm419
      %v428 = vsel %vm420, 1, 0
      %v429 = vsel %vm421, 1, 0
      %v430 = vsel %vm422, 1, 0
      %v431 = vsel %vm423, 1, 0
      %v432 = vsel %vm424, 1, 0
      %v433 = vsel %vm425, 1, 0
      %v434 = vsel %vm426, 1, 0
      %v435 = vsel %vm427, 1, 0
      %vm436 = vcmp.eq.s32.totalorder %v428, 1
      %vm437 = vcmp.eq.s32.totalorder %v429, 1
      %vm438 = vcmp.eq.s32.totalorder %v430, 1
      %vm439 = vcmp.eq.s32.totalorder %v431, 1
      %vm440 = vcmp.eq.s32.totalorder %v432, 1
      %vm441 = vcmp.eq.s32.totalorder %v433, 1
      %vm442 = vcmp.eq.s32.totalorder %v434, 1
      %vm443 = vcmp.eq.s32.totalorder %v435, 1
      %445 = vst [vmem:[#allocation1] ss:$2 sm:$0xff] %v203
      %s446 = scalar_lea.vmem [#allocation1], 16
      %447 = vst [vmem:[%s446] ss:$2 sm:$0xff] %v204
      %s448 = scalar_lea.vmem [#allocation1], 32
      %449 = vst [vmem:[%s448] ss:$2 sm:$0xff] %v205
      %s450 = scalar_lea.vmem [#allocation1], 48
      %451 = vst [vmem:[%s450] ss:$2 sm:$0xff] %v206
      %v452 = vld.sshfl [vmem:[#allocation1] sm:$0xff pattern:$0x75316420]
      %v453 = vld.sshfl [vmem:[#allocation1 + $0x8] sm:$0xff pattern:$0x75316420]
      %v454 = vld.sshfl [vmem:[#allocation1 + $0x10] sm:$0xff pattern:$0x75316420]
      %v455 = vld.sshfl [vmem:[#allocation1 + $0x18] sm:$0xff pattern:$0x75316420]
      %v456 = vld.sshfl [vmem:[#allocation1 + $0x20] sm:$0xff pattern:$0x75316420]
      %v457 = vld.sshfl [vmem:[#allocation1 + $0x28] sm:$0xff pattern:$0x75316420]
      %v458 = vld.sshfl [vmem:[#allocation1 + $0x30] sm:$0xff pattern:$0x75316420]
      %v459 = vld.sshfl [vmem:[#allocation1 + $0x38] sm:$0xff pattern:$0x75316420]
      %460 = vst [vmem:[#allocation1] ss:$2 sm:$0xff] %v207
      %v461 = vld.sshfl [vmem:[#allocation1] sm:$0xff pattern:$0x75316420]
      %462 = vrot.lane.b32.xlu0 %v452, 126
      %v463 = vpop.permute.xlu0 %462
      %464 = vrot.lane.b32.xlu0 %v453, 126
      %v465 = vpop.permute.xlu0 %464
      %466 = vrot.lane.b32.xlu0 %v454, 126
      %v467 = vpop.permute.xlu0 %466
      %468 = vrot.lane.b32.xlu0 %v455, 126
      %v469 = vpop.permute.xlu0 %468
      %470 = vrot.lane.b32.xlu0 %v456, 126
      %v471 = vpop.permute.xlu0 %470
      %472 = vrot.lane.b32.xlu0 %v457, 126
      %v473 = vpop.permute.xlu0 %472
      %474 = vrot.lane.b32.xlu0 %v458, 126
      %v475 = vpop.permute.xlu0 %474
      %476 = vrot.lane.b32.xlu0 %v459, 126
      %v477 = vpop.permute.xlu0 %476
      %478 = vrot.lane.b32.xlu0 %v461, 126
      %v479 = vpop.permute.xlu0 %478
      %vm480 = vcmask 1031168
      %v481 = vsel %vm480, %v463, %v465
      %v482 = vsel %vm480, %v465, %v467
      %v483 = vsel %vm480, %v467, %v469
      %v484 = vsel %vm480, %v469, %v471
      %v485 = vsel %vm480, %v471, %v473
      %v486 = vsel %vm480, %v473, %v475
      %v487 = vsel %vm480, %v475, %v477
      %v488 = vsel %vm480, %v477, %v479
      %v497 = vsel %vm436, %v481, 0.0
      %v498 = vsel %vm437, %v482, 0.0
      %v499 = vsel %vm438, %v483, 0.0
      %v500 = vsel %vm439, %v484, 0.0
      %v501 = vsel %vm440, %v485, 0.0
      %v502 = vsel %vm441, %v486, 0.0
      %v503 = vsel %vm442, %v487, 0.0
      %v504 = vsel %vm443, %v488, 0.0
      %505 = vst [vmem:[#allocation1] ss:$2 sm:$0xff] %v203
      %s506 = scalar_lea.vmem [#allocation1], 16
      %507 = vst [vmem:[%s506] ss:$2 sm:$0xff] %v204
      %s508 = scalar_lea.vmem [#allocation1], 32
      %509 = vst [vmem:[%s508] ss:$2 sm:$0xff] %v205
      %s510 = scalar_lea.vmem [#allocation1], 48
      %511 = vst [vmem:[%s510] ss:$2 sm:$0xff] %v206
      %v512 = vld.sshfl [vmem:[#allocation1] sm:$0xff pattern:$0x75316420]
      %v513 = vld.sshfl [vmem:[#allocation1 + $0x8] sm:$0xff pattern:$0x75316420]
      %v514 = vld.sshfl [vmem:[#allocation1 + $0x10] sm:$0xff pattern:$0x75316420]
      %v515 = vld.sshfl [vmem:[#allocation1 + $0x18] sm:$0xff pattern:$0x75316420]
      %v516 = vld.sshfl [vmem:[#allocation1 + $0x20] sm:$0xff pattern:$0x75316420]
      %v517 = vld.sshfl [vmem:[#allocation1 + $0x28] sm:$0xff pattern:$0x75316420]
      %v518 = vld.sshfl [vmem:[#allocation1 + $0x30] sm:$0xff pattern:$0x75316420]
      %v519 = vld.sshfl [vmem:[#allocation1 + $0x38] sm:$0xff pattern:$0x75316420]
      %520 = vst [vmem:[#allocation1] ss:$2 sm:$0xff] %v207
      %v521 = vld.sshfl [vmem:[#allocation1] sm:$0xff pattern:$0x75316420]
      %522 = vrot.lane.b32.xlu0 %v512, 96
      %v523 = vpop.permute.xlu0 %522
      %524 = vrot.lane.b32.xlu0 %v513, 96
      %v525 = vpop.permute.xlu0 %524
      %526 = vrot.lane.b32.xlu0 %v514, 96
      %v527 = vpop.permute.xlu0 %526
      %528 = vrot.lane.b32.xlu0 %v515, 96
      %v529 = vpop.permute.xlu0 %528
      %530 = vrot.lane.b32.xlu0 %v516, 96
      %v531 = vpop.permute.xlu0 %530
      %532 = vrot.lane.b32.xlu0 %v517, 96
      %v533 = vpop.permute.xlu0 %532
      %534 = vrot.lane.b32.xlu0 %v518, 96
      %v535 = vpop.permute.xlu0 %534
      %536 = vrot.lane.b32.xlu0 %v519, 96
      %v537 = vpop.permute.xlu0 %536
      %538 = vrot.lane.b32.xlu0 %v521, 96
      %v539 = vpop.permute.xlu0 %538
      %vm540 = vcmask 785408
      %v541 = vsel %vm540, %v523, %v525
      %v542 = vsel %vm540, %v525, %v527
      %v543 = vsel %vm540, %v527, %v529
      %v544 = vsel %vm540, %v529, %v531
      %v545 = vsel %vm540, %v531, %v533
      %v546 = vsel %vm540, %v533, %v535
      %v547 = vsel %vm540, %v535, %v537
      %v548 = vsel %vm540, %v537, %v539
      %v557 = vsel %vm353, %v541, 0.0
      %v558 = vsel %vm354, %v542, 0.0
      %v559 = vsel %vm355, %v543, 0.0
      %v560 = vsel %vm356, %v544, 0.0
      %v561 = vsel %vm357, %v545, 0.0
      %v562 = vsel %vm358, %v546, 0.0
      %v563 = vsel %vm359, %v547, 0.0
      %v564 = vsel %vm360, %v548, 0.0
      %565 = vst [vmem:[#allocation1] ss:$2 sm:$0xff] %v203
      %s566 = scalar_lea.vmem [#allocation1], 16
      %567 = vst [vmem:[%s566] ss:$2 sm:$0xff] %v204
      %s568 = scalar_lea.vmem [#allocation1], 32
      %569 = vst [vmem:[%s568] ss:$2 sm:$0xff] %v205
      %s570 = scalar_lea.vmem [#allocation1], 48
      %571 = vst [vmem:[%s570] ss:$2 sm:$0xff] %v206
      %v572 = vld.sshfl [vmem:[#allocation1] sm:$0xff pattern:$0x75316420]
      %v573 = vld.sshfl [vmem:[#allocation1 + $0x8] sm:$0xff pattern:$0x75316420]
      %v574 = vld.sshfl [vmem:[#allocation1 + $0x10] sm:$0xff pattern:$0x75316420]
      %v575 = vld.sshfl [vmem:[#allocation1 + $0x18] sm:$0xff pattern:$0x75316420]
      %v576 = vld.sshfl [vmem:[#allocation1 + $0x20] sm:$0xff pattern:$0x75316420]
      %v577 = vld.sshfl [vmem:[#allocation1 + $0x28] sm:$0xff pattern:$0x75316420]
      %v578 = vld.sshfl [vmem:[#allocation1 + $0x30] sm:$0xff pattern:$0x75316420]
      %v579 = vld.sshfl [vmem:[#allocation1 + $0x38] sm:$0xff pattern:$0x75316420]
      %580 = vst [vmem:[#allocation1] ss:$2 sm:$0xff] %v207
      %v581 = vld.sshfl [vmem:[#allocation1] sm:$0xff pattern:$0x75316420]
      %582 = vrot.lane.b32.xlu0 %v572, 94
      %v583 = vpop.permute.xlu0 %582
      %584 = vrot.lane.b32.xlu0 %v573, 94
      %v585 = vpop.permute.xlu0 %584
      %586 = vrot.lane.b32.xlu0 %v574, 94
      %v587 = vpop.permute.xlu0 %586
      %588 = vrot.lane.b32.xlu0 %v575, 94
      %v589 = vpop.permute.xlu0 %588
      %590 = vrot.lane.b32.xlu0 %v576, 94
      %v591 = vpop.permute.xlu0 %590
      %592 = vrot.lane.b32.xlu0 %v577, 94
      %v593 = vpop.permute.xlu0 %592
      %594 = vrot.lane.b32.xlu0 %v578, 94
      %v595 = vpop.permute.xlu0 %594
      %596 = vrot.lane.b32.xlu0 %v579, 94
      %v597 = vpop.permute.xlu0 %596
      %598 = vrot.lane.b32.xlu0 %v581, 94
      %v599 = vpop.permute.xlu0 %598
      %vm600 = vcmask 769024
      %v601 = vsel %vm600, %v583, %v585
      %v602 = vsel %vm600, %v585, %v587
      %v603 = vsel %vm600, %v587, %v589
      %v604 = vsel %vm600, %v589, %v591
      %v605 = vsel %vm600, %v591, %v593
      %v606 = vsel %vm600, %v593, %v595
      %v607 = vsel %vm600, %v595, %v597
      %v608 = vsel %vm600, %v597, %v599
      %v617 = vsel %vm436, %v601, 0.0
      %v618 = vsel %vm437, %v602, 0.0
      %v619 = vsel %vm438, %v603, 0.0
      %v620 = vsel %vm439, %v604, 0.0
      %v621 = vsel %vm440, %v605, 0.0
      %v622 = vsel %vm441, %v606, 0.0
      %v623 = vsel %vm442, %v607, 0.0
      %v624 = vsel %vm443, %v608, 0.0
      %625 = vst [vmem:[#allocation1] ss:$2 sm:$0xff] %v203
      %s626 = scalar_lea.vmem [#allocation1], 16
      %627 = vst [vmem:[%s626] ss:$2 sm:$0xff] %v204
      %s628 = scalar_lea.vmem [#allocation1], 32
      %629 = vst [vmem:[%s628] ss:$2 sm:$0xff] %v205
      %s630 = scalar_lea.vmem [#allocation1], 48
      %631 = vst [vmem:[%s630] ss:$2 sm:$0xff] %v206
      %v632 = vld.sshfl [vmem:[#allocation1] sm:$0xff pattern:$0x75316420]
      %v633 = vld.sshfl [vmem:[#allocation1 + $0x8] sm:$0xff pattern:$0x75316420]
      %v634 = vld.sshfl [vmem:[#allocation1 + $0x10] sm:$0xff pattern:$0x75316420]
      %v635 = vld.sshfl [vmem:[#allocation1 + $0x18] sm:$0xff pattern:$0x75316420]
      %v636 = vld.sshfl [vmem:[#allocation1 + $0x20] sm:$0xff pattern:$0x75316420]
      %v637 = vld.sshfl [vmem:[#allocation1 + $0x28] sm:$0xff pattern:$0x75316420]
      %v638 = vld.sshfl [vmem:[#allocation1 + $0x30] sm:$0xff pattern:$0x75316420]
      %v639 = vld.sshfl [vmem:[#allocation1 + $0x38] sm:$0xff pattern:$0x75316420]
      %640 = vst [vmem:[#allocation1] ss:$2 sm:$0xff] %v207
      %v641 = vld.sshfl [vmem:[#allocation1] sm:$0xff pattern:$0x75316420]
      %642 = vrot.lane.b32.xlu0 %v632, 64
      %v643 = vpop.permute.xlu0 %642
      %644 = vrot.lane.b32.xlu0 %v633, 64
      %v645 = vpop.permute.xlu0 %644
      %646 = vrot.lane.b32.xlu0 %v634, 64
      %v647 = vpop.permute.xlu0 %646
      %648 = vrot.lane.b32.xlu0 %v635, 64
      %v649 = vpop.permute.xlu0 %648
      %650 = vrot.lane.b32.xlu0 %v636, 64
      %v651 = vpop.permute.xlu0 %650
      %652 = vrot.lane.b32.xlu0 %v637, 64
      %v653 = vpop.permute.xlu0 %652
      %654 = vrot.lane.b32.xlu0 %v638, 64
      %v655 = vpop.permute.xlu0 %654
      %656 = vrot.lane.b32.xlu0 %v639, 64
      %v657 = vpop.permute.xlu0 %656
      %658 = vrot.lane.b32.xlu0 %v641, 64
      %v659 = vpop.permute.xlu0 %658
      %vm660 = vcmask 523264
      %v661 = vsel %vm660, %v643, %v645
      %v662 = vsel %vm660, %v645, %v647
      %v663 = vsel %vm660, %v647, %v649
      %v664 = vsel %vm660, %v649, %v651
      %v665 = vsel %vm660, %v651, %v653
      %v666 = vsel %vm660, %v653, %v655
      %v667 = vsel %vm660, %v655, %v657
      %v668 = vsel %vm660, %v657, %v659
      %v677 = vsel %vm353, %v661, 0.0
      %v678 = vsel %vm354, %v662, 0.0
      %v679 = vsel %vm355, %v663, 0.0
      %v680 = vsel %vm356, %v664, 0.0
      %v681 = vsel %vm357, %v665, 0.0
      %v682 = vsel %vm358, %v666, 0.0
      %v683 = vsel %vm359, %v667, 0.0
      %v684 = vsel %vm360, %v668, 0.0
      %685 = vst [vmem:[#allocation1] ss:$2 sm:$0xff] %v203
      %s686 = scalar_lea.vmem [#allocation1], 16
      %687 = vst [vmem:[%s686] ss:$2 sm:$0xff] %v204
      %s688 = scalar_lea.vmem [#allocation1], 32
      %689 = vst [vmem:[%s688] ss:$2 sm:$0xff] %v205
      %s690 = scalar_lea.vmem [#allocation1], 48
      %691 = vst [vmem:[%s690] ss:$2 sm:$0xff] %v206
      %v692 = vld.sshfl [vmem:[#allocation1] sm:$0xff pattern:$0x75316420]
      %v693 = vld.sshfl [vmem:[#allocation1 + $0x8] sm:$0xff pattern:$0x75316420]
      %v694 = vld.sshfl [vmem:[#allocation1 + $0x10] sm:$0xff pattern:$0x75316420]
      %v695 = vld.sshfl [vmem:[#allocation1 + $0x18] sm:$0xff pattern:$0x75316420]
      %v696 = vld.sshfl [vmem:[#allocation1 + $0x20] sm:$0xff pattern:$0x75316420]
      %v697 = vld.sshfl [vmem:[#allocation1 + $0x28] sm:$0xff pattern:$0x75316420]
      %v698 = vld.sshfl [vmem:[#allocation1 + $0x30] sm:$0xff pattern:$0x75316420]
      %v699 = vld.sshfl [vmem:[#allocation1 + $0x38] sm:$0xff pattern:$0x75316420]
      %700 = vst [vmem:[#allocation1] ss:$2 sm:$0xff] %v207
      %v701 = vld.sshfl [vmem:[#allocation1] sm:$0xff pattern:$0x75316420]
      %702 = vrot.lane.b32.xlu0 %v692, 62
      %v703 = vpop.permute.xlu0 %702
      %704 = vrot.lane.b32.xlu0 %v693, 62
      %v705 = vpop.permute.xlu0 %704
      %706 = vrot.lane.b32.xlu0 %v694, 62
      %v707 = vpop.permute.xlu0 %706
      %708 = vrot.lane.b32.xlu0 %v695, 62
      %v709 = vpop.permute.xlu0 %708
      %710 = vrot.lane.b32.xlu0 %v696, 62
      %v711 = vpop.permute.xlu0 %710
      %712 = vrot.lane.b32.xlu0 %v697, 62
      %v713 = vpop.permute.xlu0 %712
      %714 = vrot.lane.b32.xlu0 %v698, 62
      %v715 = vpop.permute.xlu0 %714
      %716 = vrot.lane.b32.xlu0 %v699, 62
      %v717 = vpop.permute.xlu0 %716
      %718 = vrot.lane.b32.xlu0 %v701, 62
      %v719 = vpop.permute.xlu0 %718
      %vm720 = vcmask 506880
      %v721 = vsel %vm720, %v703, %v705
      %v722 = vsel %vm720, %v705, %v707
      %v723 = vsel %vm720, %v707, %v709
      %v724 = vsel %vm720, %v709, %v711
      %v725 = vsel %vm720, %v711, %v713
      %v726 = vsel %vm720, %v713, %v715
      %v727 = vsel %vm720, %v715, %v717
      %v728 = vsel %vm720, %v717, %v719
      %v737 = vsel %vm436, %v721, 0.0
      %v738 = vsel %vm437, %v722, 0.0
      %v739 = vsel %vm438, %v723, 0.0
      %v740 = vsel %vm439, %v724, 0.0
      %v741 = vsel %vm440, %v725, 0.0
      %v742 = vsel %vm441, %v726, 0.0
      %v743 = vsel %vm442, %v727, 0.0
      %v744 = vsel %vm443, %v728, 0.0
      %s745 = scalar_lea.vmem [#allocation1], 1
      %746 = vst [vmem:[%s745] ss:$2 sm:$0xff] %v203
      %s747 = scalar_lea.vmem [#allocation1], 17
      %748 = vst [vmem:[%s747] ss:$2 sm:$0xff] %v204
      %s749 = scalar_lea.vmem [#allocation1], 33
      %750 = vst [vmem:[%s749] ss:$2 sm:$0xff] %v205
      %s751 = scalar_lea.vmem [#allocation1], 49
      %752 = vst [vmem:[%s751] ss:$2 sm:$0xff] %v206
      %v753 = vld.sshfl [vmem:[#allocation1] sm:$0xff pattern:$0x75316420]
      %v754 = vld.sshfl [vmem:[#allocation1 + $0x8] sm:$0xff pattern:$0x75316420]
      %v755 = vld.sshfl [vmem:[#allocation1 + $0x10] sm:$0xff pattern:$0x75316420]
      %v756 = vld.sshfl [vmem:[#allocation1 + $0x18] sm:$0xff pattern:$0x75316420]
      %v757 = vld.sshfl [vmem:[#allocation1 + $0x20] sm:$0xff pattern:$0x75316420]
      %v758 = vld.sshfl [vmem:[#allocation1 + $0x28] sm:$0xff pattern:$0x75316420]
      %v759 = vld.sshfl [vmem:[#allocation1 + $0x30] sm:$0xff pattern:$0x75316420]
      %v760 = vld.sshfl [vmem:[#allocation1 + $0x38] sm:$0xff pattern:$0x75316420]
      %761 = vst [vmem:[%s745] ss:$2 sm:$0xff] %v207
      %v762 = vld.sshfl [vmem:[#allocation1] sm:$0xff pattern:$0x75316420]
      %763 = vrot.lane.b32.xlu0 %v753, 127
      %v764 = vpop.permute.xlu0 %763
      %765 = vrot.lane.b32.xlu0 %v754, 127
      %v766 = vpop.permute.xlu0 %765
      %767 = vrot.lane.b32.xlu0 %v755, 127
      %v768 = vpop.permute.xlu0 %767
      %769 = vrot.lane.b32.xlu0 %v756, 127
      %v770 = vpop.permute.xlu0 %769
      %771 = vrot.lane.b32.xlu0 %v757, 127
      %v772 = vpop.permute.xlu0 %771
      %773 = vrot.lane.b32.xlu0 %v758, 127
      %v774 = vpop.permute.xlu0 %773
      %775 = vrot.lane.b32.xlu0 %v759, 127
      %v776 = vpop.permute.xlu0 %775
      %777 = vrot.lane.b32.xlu0 %v760, 127
      %v778 = vpop.permute.xlu0 %777
      %779 = vrot.lane.b32.xlu0 %v762, 127
      %v780 = vpop.permute.xlu0 %779
      %vm781 = vcmask 1039360
      %v782 = vsel %vm781, %v764, %v766
      %v783 = vsel %vm781, %v766, %v768
      %v784 = vsel %vm781, %v768, %v770
      %v785 = vsel %vm781, %v770, %v772
      %v786 = vsel %vm781, %v772, %v774
      %v787 = vsel %vm781, %v774, %v776
      %v788 = vsel %vm781, %v776, %v778
      %v789 = vsel %vm781, %v778, %v780
      %v806 = vrot.slane %v557, 4
      %v807 = vrot.slane %v558, 4
      %v808 = vrot.slane %v559, 4
      %v809 = vrot.slane %v560, 4
      %v810 = vrot.slane %v561, 4
      %v811 = vrot.slane %v562, 4
      %v812 = vrot.slane %v563, 4
      %v813 = vrot.slane %v564, 4
      %822 = vst [vmem:[#allocation1] ss:$2 sm:$0xff] %v203
      %s823 = scalar_lea.vmem [#allocation1], 16
      %824 = vst [vmem:[%s823] ss:$2 sm:$0xff] %v204
      %s825 = scalar_lea.vmem [#allocation1], 32
      %826 = vst [vmem:[%s825] ss:$2 sm:$0xff] %v205
      %s827 = scalar_lea.vmem [#allocation1], 48
      %828 = vst [vmem:[%s827] ss:$2 sm:$0xff] %v206
      %v829 = vld.sshfl [vmem:[#allocation1] sm:$0xff pattern:$0x75316420]
      %v830 = vld.sshfl [vmem:[#allocation1 + $0x8] sm:$0xff pattern:$0x75316420]
      %v831 = vld.sshfl [vmem:[#allocation1 + $0x10] sm:$0xff pattern:$0x75316420]
      %v832 = vld.sshfl [vmem:[#allocation1 + $0x18] sm:$0xff pattern:$0x75316420]
      %v833 = vld.sshfl [vmem:[#allocation1 + $0x20] sm:$0xff pattern:$0x75316420]
      %v834 = vld.sshfl [vmem:[#allocation1 + $0x28] sm:$0xff pattern:$0x75316420]
      %v835 = vld.sshfl [vmem:[#allocation1 + $0x30] sm:$0xff pattern:$0x75316420]
      %v836 = vld.sshfl [vmem:[#allocation1 + $0x38] sm:$0xff pattern:$0x75316420]
      %837 = vst [vmem:[#allocation1] ss:$2 sm:$0xff] %v207
      %v838 = vld.sshfl [vmem:[#allocation1] sm:$0xff pattern:$0x75316420]
      %839 = vrot.lane.b32.xlu0 %v829, 95
      %v840 = vpop.permute.xlu0 %839
      %841 = vrot.lane.b32.xlu0 %v830, 95
      %v842 = vpop.permute.xlu0 %841
      %843 = vrot.lane.b32.xlu0 %v831, 95
      %v844 = vpop.permute.xlu0 %843
      %845 = vrot.lane.b32.xlu0 %v832, 95
      %v846 = vpop.permute.xlu0 %845
      %847 = vrot.lane.b32.xlu0 %v833, 95
      %v848 = vpop.permute.xlu0 %847
      %849 = vrot.lane.b32.xlu0 %v834, 95
      %v850 = vpop.permute.xlu0 %849
      %851 = vrot.lane.b32.xlu0 %v835, 95
      %v852 = vpop.permute.xlu0 %851
      %853 = vrot.lane.b32.xlu0 %v836, 95
      %v854 = vpop.permute.xlu0 %853
      %855 = vrot.lane.b32.xlu0 %v838, 95
      %v856 = vpop.permute.xlu0 %855
      %vm857 = vcmask 777216
      %v858 = vsel %vm857, %v840, %v842
      %v859 = vsel %vm857, %v842, %v844
      %v860 = vsel %vm857, %v844, %v846
      %v861 = vsel %vm857, %v846, %v848
      %v862 = vsel %vm857, %v848, %v850
      %v863 = vsel %vm857, %v850, %v852
      %v864 = vsel %vm857, %v852, %v854
      %v865 = vsel %vm857, %v854, %v856
      %v882 = vrot.slane %v617, 4
      %v883 = vrot.slane %v618, 4
      %v884 = vrot.slane %v619, 4
      %v885 = vrot.slane %v620, 4
      %v886 = vrot.slane %v621, 4
      %v887 = vrot.slane %v622, 4
      %v888 = vrot.slane %v623, 4
      %v889 = vrot.slane %v624, 4
      %s898 = scalar_lea.vmem [#allocation1], 1
      %899 = vst [vmem:[%s898] ss:$2 sm:$0xff] %v203
      %s900 = scalar_lea.vmem [#allocation1], 17
      %901 = vst [vmem:[%s900] ss:$2 sm:$0xff] %v204
      %s902 = scalar_lea.vmem [#allocation1], 33
      %903 = vst [vmem:[%s902] ss:$2 sm:$0xff] %v205
      %s904 = scalar_lea.vmem [#allocation1], 49
      %905 = vst [vmem:[%s904] ss:$2 sm:$0xff] %v206
      %v906 = vld.sshfl [vmem:[#allocation1] sm:$0xff pattern:$0x75316420]
      %v907 = vld.sshfl [vmem:[#allocation1 + $0x8] sm:$0xff pattern:$0x75316420]
      %v908 = vld.sshfl [vmem:[#allocation1 + $0x10] sm:$0xff pattern:$0x75316420]
      %v909 = vld.sshfl [vmem:[#allocation1 + $0x18] sm:$0xff pattern:$0x75316420]
      %v910 = vld.sshfl [vmem:[#allocation1 + $0x20] sm:$0xff pattern:$0x75316420]
      %v911 = vld.sshfl [vmem:[#allocation1 + $0x28] sm:$0xff pattern:$0x75316420]
      %v912 = vld.sshfl [vmem:[#allocation1 + $0x30] sm:$0xff pattern:$0x75316420]
      %v913 = vld.sshfl [vmem:[#allocation1 + $0x38] sm:$0xff pattern:$0x75316420]
      %914 = vst [vmem:[%s898] ss:$2 sm:$0xff] %v207
      %v915 = vld.sshfl [vmem:[#allocation1] sm:$0xff pattern:$0x75316420]
      %916 = vrot.lane.b32.xlu0 %v906, 63
      %v917 = vpop.permute.xlu0 %916
      %918 = vrot.lane.b32.xlu0 %v907, 63
      %v919 = vpop.permute.xlu0 %918
      %920 = vrot.lane.b32.xlu0 %v908, 63
      %v921 = vpop.permute.xlu0 %920
      %922 = vrot.lane.b32.xlu0 %v909, 63
      %v923 = vpop.permute.xlu0 %922
      %924 = vrot.lane.b32.xlu0 %v910, 63
      %v925 = vpop.permute.xlu0 %924
      %926 = vrot.lane.b32.xlu0 %v911, 63
      %v927 = vpop.permute.xlu0 %926
      %928 = vrot.lane.b32.xlu0 %v912, 63
      %v929 = vpop.permute.xlu0 %928
      %930 = vrot.lane.b32.xlu0 %v913, 63
      %v931 = vpop.permute.xlu0 %930
      %932 = vrot.lane.b32.xlu0 %v915, 63
      %v933 = vpop.permute.xlu0 %932
      %vm934 = vcmask 515072
      %v935 = vsel %vm934, %v917, %v919
      %v936 = vsel %vm934, %v919, %v921
      %v937 = vsel %vm934, %v921, %v923
      %v938 = vsel %vm934, %v923, %v925
      %v939 = vsel %vm934, %v925, %v927
      %v940 = vsel %vm934, %v927, %v929
      %v941 = vsel %vm934, %v929, %v931
      %v942 = vsel %vm934, %v931, %v933
      %vm951 = vcmask 1043456
      %v952 = vsel %vm951, %v388, %v782
      %v953 = vsel %vm951, %v389, %v783
      %v954 = vsel %vm951, %v390, %v784
      %v955 = vsel %vm951, %v391, %v785
      %v956 = vsel %vm951, %v392, %v786
      %v957 = vsel %vm951, %v393, %v787
      %v958 = vsel %vm951, %v394, %v788
      %v959 = vsel %vm951, %v395, %v789
      %v960 = vsel %vm951, %v497, %v806
      %v961 = vsel %vm951, %v498, %v807
      %v962 = vsel %vm951, %v499, %v808
      %v963 = vsel %vm951, %v500, %v809
      %v964 = vsel %vm951, %v501, %v810
      %v965 = vsel %vm951, %v502, %v811
      %v966 = vsel %vm951, %v503, %v812
      %v967 = vsel %vm951, %v504, %v813
      %v968 = vsel %vm951, %v858, %v882
      %v969 = vsel %vm951, %v859, %v883
      %v970 = vsel %vm951, %v860, %v884
      %v971 = vsel %vm951, %v861, %v885
      %v972 = vsel %vm951, %v862, %v886
      %v973 = vsel %vm951, %v863, %v887
      %v974 = vsel %vm951, %v864, %v888
      %v975 = vsel %vm951, %v865, %v889
      %v976 = vsel %vm951, %v677, %v935
      %v977 = vsel %vm951, %v678, %v936
      %v978 = vsel %vm951, %v679, %v937
      %v979 = vsel %vm951, %v680, %v938
      %v980 = vsel %vm951, %v681, %v939
      %v981 = vsel %vm951, %v682, %v940
      %v982 = vsel %vm951, %v683, %v941
      %v983 = vsel %vm951, %v684, %v942
      %v984 = vpack.c.bf16 %v960, %v952
      %v985 = vpack.c.bf16 %v961, %v953
      %v986 = vpack.c.bf16 %v962, %v954
      %v987 = vpack.c.bf16 %v963, %v955
      %v988 = vpack.c.bf16 %v964, %v956
      %v989 = vpack.c.bf16 %v965, %v957
      %v990 = vpack.c.bf16 %v966, %v958
      %v991 = vpack.c.bf16 %v967, %v959
      %v992 = vpack.c.bf16 %v976, %v968
      %v993 = vpack.c.bf16 %v977, %v969
      %v994 = vpack.c.bf16 %v978, %v970
      %v995 = vpack.c.bf16 %v979, %v971
      %v996 = vpack.c.bf16 %v980, %v972
      %v997 = vpack.c.bf16 %v981, %v973
      %v998 = vpack.c.bf16 %v982, %v974
      %v999 = vpack.c.bf16 %v983, %v975
      %v1000 = vpack.c.bf16 %v737, %v737
      %v1001 = vpack.c.bf16 %v738, %v738
      %v1002 = vpack.c.bf16 %v739, %v739
      %v1003 = vpack.c.bf16 %v740, %v740
      %v1004 = vpack.c.bf16 %v741, %v741
      %v1005 = vpack.c.bf16 %v742, %v742
      %v1006 = vpack.c.bf16 %v743, %v743
      %v1007 = vpack.c.bf16 %v744, %v744
      %v1008 = vld [vmem:[%s1] sm:$0xf]
      %v1009 = vld [vmem:[%s1 + $0x4] sm:$0xf]
      %v1010 = vld [vmem:[%s2] sm:$0xff]
      %v1011 = vld [vmem:[%s2 + $0x8] sm:$0xff]
      %1013 = vset.pattern.permute.xlu0 0
      %1014 = vperm.xlu0 %1013, %v1010
      %v1015 = vpop.permute.xlu0 %1014
      %1018 = vset.pattern.permute.xlu0 0
      %1019 = vperm.xlu0 %1018, %v1011
      %v1020 = vpop.permute.xlu0 %1019
      %v1024 = vunpack.c.l.b16 %v1008
      %v1025 = vunpack.c.l.b16 %v1009
      %v1026 = vpack.c.b16 %v1025, %v1024
      %vm1027 = vcmask 293888
      %v1029 = vsel %vm1027, %v1026, 0
      %vm1031 = vcmask 1041408
      %v1033 = vsel %vm1031, %v1000, 0
      %v1036 = vsel %vm1031, %v1001, 0
      %v1039 = vsel %vm1031, %v1002, 0
      %v1042 = vsel %vm1031, %v1003, 0
      %v1045 = vsel %vm1031, %v1004, 0
      %v1048 = vsel %vm1031, %v1005, 0
      %v1051 = vsel %vm1031, %v1006, 0
      %v1054 = vsel %vm1031, %v1007, 0
      %1056 = vmatpush.bf16.msra.mxu0 0
      %1057 = vmatpush.bf16.msra.mxu0 0
      %1058 = vmatpush.bf16.msra.mxu0 0
      %1059 = vmatpush.bf16.msra.mxu0 0
      %1060 = vmatpush.bf16.msra.mxu0 0
      %1061 = vmatpush.bf16.msra.mxu0 %v1033
      %1062 = vmatpush.bf16.msra.mxu0 %v992
      %1063 = vmatpush.bf16.msra.mxu0 %v984
      %1064 = vmatmul.bf16.gmra.mxu0 %v1029
      %v1065 = vpop.f32.mrf.mxu0
      %v1066 = vadd.f32 %v1015, %v1065
      %v1067 = vpop.f32.mrf.mxu0
      %v1068 = vadd.f32 %v1020, %v1067
      %1069 = vdwg.mxu0
      %1070 = vmatpush.bf16.msra.mxu0 0
      %1071 = vmatpush.bf16.msra.mxu0 0
      %1072 = vmatpush.bf16.msra.mxu0 0
      %1073 = vmatpush.bf16.msra.mxu0 0
      %1074 = vmatpush.bf16.msra.mxu0 0
      %1075 = vmatpush.bf16.msra.mxu0 %v1036
      %1076 = vmatpush.bf16.msra.mxu0 %v993
      %1077 = vmatpush.bf16.msra.mxu0 %v985
      %1078 = vmatmul.bf16.gmra.mxu0 %v1029
      %v1079 = vpop.f32.mrf.mxu0
      %v1080 = vadd.f32 %v1015, %v1079
      %v1081 = vpop.f32.mrf.mxu0
      %v1082 = vadd.f32 %v1020, %v1081
      %1083 = vdwg.mxu0
      %1084 = vmatpush.bf16.msra.mxu0 0
      %1085 = vmatpush.bf16.msra.mxu0 0
      %1086 = vmatpush.bf16.msra.mxu0 0
      %1087 = vmatpush.bf16.msra.mxu0 0
      %1088 = vmatpush.bf16.msra.mxu0 0
      %1089 = vmatpush.bf16.msra.mxu0 %v1039
      %1090 = vmatpush.bf16.msra.mxu0 %v994
      %1091 = vmatpush.bf16.msra.mxu0 %v986
      %1092 = vmatmul.bf16.gmra.mxu0 %v1029
      %v1093 = vpop.f32.mrf.mxu0
      %v1094 = vadd.f32 %v1015, %v1093
      %v1095 = vpop.f32.mrf.mxu0
      %v1096 = vadd.f32 %v1020, %v1095
      %1097 = vdwg.mxu0
      %1098 = vmatpush.bf16.msra.mxu0 0
      %1099 = vmatpush.bf16.msra.mxu0 0
      %1100 = vmatpush.bf16.msra.mxu0 0
      %1101 = vmatpush.bf16.msra.mxu0 0
      %1102 = vmatpush.bf16.msra.mxu0 0
      %1103 = vmatpush.bf16.msra.mxu0 %v1042
      %1104 = vmatpush.bf16.msra.mxu0 %v995
      %1105 = vmatpush.bf16.msra.mxu0 %v987
      %1106 = vmatmul.bf16.gmra.mxu0 %v1029
      %v1107 = vpop.f32.mrf.mxu0
      %v1108 = vadd.f32 %v1015, %v1107
      %v1109 = vpop.f32.mrf.mxu0
      %v1110 = vadd.f32 %v1020, %v1109
      %1111 = vdwg.mxu0
      %1112 = vmatpush.bf16.msra.mxu0 0
      %1113 = vmatpush.bf16.msra.mxu0 0
      %1114 = vmatpush.bf16.msra.mxu0 0
      %1115 = vmatpush.bf16.msra.mxu0 0
      %1116 = vmatpush.bf16.msra.mxu0 0
      %1117 = vmatpush.bf16.msra.mxu0 %v1045
      %1118 = vmatpush.bf16.msra.mxu0 %v996
      %1119 = vmatpush.bf16.msra.mxu0 %v988
      %1120 = vmatmul.bf16.gmra.mxu0 %v1029
      %v1121 = vpop.f32.mrf.mxu0
      %v1122 = vadd.f32 %v1015, %v1121
      %v1123 = vpop.f32.mrf.mxu0
      %v1124 = vadd.f32 %v1020, %v1123
      %1125 = vdwg.mxu0
      %1126 = vmatpush.bf16.msra.mxu0 0
      %1127 = vmatpush.bf16.msra.mxu0 0
      %1128 = vmatpush.bf16.msra.mxu0 0
      %1129 = vmatpush.bf16.msra.mxu0 0
      %1130 = vmatpush.bf16.msra.mxu0 0
      %1131 = vmatpush.bf16.msra.mxu0 %v1048
      %1132 = vmatpush.bf16.msra.mxu0 %v997
      %1133 = vmatpush.bf16.msra.mxu0 %v989
      %1134 = vmatmul.bf16.gmra.mxu0 %v1029
      %v1135 = vpop.f32.mrf.mxu0
      %v1136 = vadd.f32 %v1015, %v1135
      %v1137 = vpop.f32.mrf.mxu0
      %v1138 = vadd.f32 %v1020, %v1137
      %1139 = vdwg.mxu0
      %1140 = vmatpush.bf16.msra.mxu0 0
      %1141 = vmatpush.bf16.msra.mxu0 0
      %1142 = vmatpush.bf16.msra.mxu0 0
      %1143 = vmatpush.bf16.msra.mxu0 0
      %1144 = vmatpush.bf16.msra.mxu0 0
      %1145 = vmatpush.bf16.msra.mxu0 %v1051
      %1146 = vmatpush.bf16.msra.mxu0 %v998
      %1147 = vmatpush.bf16.msra.mxu0 %v990
      %1148 = vmatmul.bf16.gmra.mxu0 %v1029
      %v1149 = vpop.f32.mrf.mxu0
      %v1150 = vadd.f32 %v1015, %v1149
      %v1151 = vpop.f32.mrf.mxu0
      %v1152 = vadd.f32 %v1020, %v1151
      %1153 = vdwg.mxu0
      %1154 = vmatpush.bf16.msra.mxu0 0
      %1155 = vmatpush.bf16.msra.mxu0 0
      %1156 = vmatpush.bf16.msra.mxu0 0
      %1157 = vmatpush.bf16.msra.mxu0 0
      %1158 = vmatpush.bf16.msra.mxu0 0
      %1159 = vmatpush.bf16.msra.mxu0 %v1054
      %1160 = vmatpush.bf16.msra.mxu0 %v999
      %1161 = vmatpush.bf16.msra.mxu0 %v991
      %1162 = vmatmul.bf16.gmra.mxu0 %v1029
      %v1163 = vpop.f32.mrf.mxu0
      %v1164 = vadd.f32 %v1015, %v1163
      %v1165 = vpop.f32.mrf.mxu0
      %v1166 = vadd.f32 %v1020, %v1165
      %1167 = vdwg.mxu0
      %s1168 = sld [smem:[#allocation2]]
      %vm1169 = vcmp.ge.f32.partialorder %v1066, 0.0
      %vm1170 = vcmp.ge.f32.partialorder %v1080, 0.0
      %vm1171 = vcmp.ge.f32.partialorder %v1094, 0.0
      %vm1172 = vcmp.ge.f32.partialorder %v1108, 0.0
      %vm1173 = vcmp.ge.f32.partialorder %v1122, 0.0
      %vm1174 = vcmp.ge.f32.partialorder %v1136, 0.0
      %vm1175 = vcmp.ge.f32.partialorder %v1150, 0.0
      %vm1176 = vcmp.ge.f32.partialorder %v1164, 0.0
      %vm1177 = vcmp.ge.f32.partialorder %v1068, 0.0
      %vm1178 = vcmp.ge.f32.partialorder %v1082, 0.0
      %vm1179 = vcmp.ge.f32.partialorder %v1096, 0.0
      %vm1180 = vcmp.ge.f32.partialorder %v1110, 0.0
      %vm1181 = vcmp.ge.f32.partialorder %v1124, 0.0
      %vm1182 = vcmp.ge.f32.partialorder %v1138, 0.0
      %vm1183 = vcmp.ge.f32.partialorder %v1152, 0.0
      %vm1184 = vcmp.ge.f32.partialorder %v1166, 0.0
      %v1185 = vstv %s1168
      %v1186 = vmul.f32 %v1185, %v1066
      %v1187 = vmul.f32 %v1185, %v1080
      %v1188 = vmul.f32 %v1185, %v1094
      %v1189 = vmul.f32 %v1185, %v1108
      %v1190 = vmul.f32 %v1185, %v1122
      %v1191 = vmul.f32 %v1185, %v1136
      %v1192 = vmul.f32 %v1185, %v1150
      %v1193 = vmul.f32 %v1185, %v1164
      %v1194 = vmul.f32 %v1185, %v1068
      %v1195 = vmul.f32 %v1185, %v1082
      %v1196 = vmul.f32 %v1185, %v1096
      %v1197 = vmul.f32 %v1185, %v1110
      %v1198 = vmul.f32 %v1185, %v1124
      %v1199 = vmul.f32 %v1185, %v1138
      %v1200 = vmul.f32 %v1185, %v1152
      %v1201 = vmul.f32 %v1185, %v1166
      %v1202 = vsel %vm1169, %v1066, %v1186
      %v1203 = vsel %vm1170, %v1080, %v1187
      %v1204 = vsel %vm1171, %v1094, %v1188
      %v1205 = vsel %vm1172, %v1108, %v1189
      %v1206 = vsel %vm1173, %v1122, %v1190
      %v1207 = vsel %vm1174, %v1136, %v1191
      %v1208 = vsel %vm1175, %v1150, %v1192
      %v1209 = vsel %vm1176, %v1164, %v1193
      %v1210 = vsel %vm1177, %v1068, %v1194
      %v1211 = vsel %vm1178, %v1082, %v1195
      %v1212 = vsel %vm1179, %v1096, %v1196
      %v1213 = vsel %vm1180, %v1110, %v1197
      %v1214 = vsel %vm1181, %v1124, %v1198
      %v1215 = vsel %vm1182, %v1138, %v1199
      %v1216 = vsel %vm1183, %v1152, %v1200
      %v1217 = vsel %vm1184, %v1166, %v1201
      %1218 = vst [vmem:[%s198] sm:$0xff] %v1202
      %1219 = vst [vmem:[%s198 + $0x8] sm:$0xff] %v1203
      %1220 = vst [vmem:[%s198 + $0x10] sm:$0xff] %v1204
      %1221 = vst [vmem:[%s198 + $0x18] sm:$0xff] %v1205
      %1222 = vst [vmem:[%s198 + $0x20] sm:$0xff] %v1206
      %1223 = vst [vmem:[%s198 + $0x28] sm:$0xff] %v1207
      %1224 = vst [vmem:[%s198 + $0x30] sm:$0xff] %v1208
      %1225 = vst [vmem:[%s198 + $0x38] sm:$0xff] %v1209
      %1226 = vst [vmem:[%s198 + $0x40] sm:$0xff] %v1210
      %1227 = vst [vmem:[%s198 + $0x48] sm:$0xff] %v1211
      %1228 = vst [vmem:[%s198 + $0x50] sm:$0xff] %v1212
      %1229 = vst [vmem:[%s198 + $0x58] sm:$0xff] %v1213
      %1230 = vst [vmem:[%s198 + $0x60] sm:$0xff] %v1214
      %1231 = vst [vmem:[%s198 + $0x68] sm:$0xff] %v1215
      %1232 = vst [vmem:[%s198 + $0x70] sm:$0xff] %v1216
      %1233 = vst [vmem:[%s198 + $0x78] sm:$0xff] %v1217
      %p1234 = scmp.lt.s32.totalorder %s16, 1
      %s1235 = scalar_select %p1234, %s16, 1
      %s1236 = smul.addr %s1235, 16
      %s1237 = smul.addr %s1236, 8
      %s1238 = scalar_lea.vmem %s4, %s1237
      // Predicated region
      $region37: #{upsampler_forward.3} parent=35 // pred_check
        %p1239 = pneg %p123
      $region38: #{upsampler_forward.3} parent=35 // pred_check_branch
        %1241 = sbr.rel (%p1239) target = $region40
      $region39: #{upsampler_forward.3} parent=35 // pred_region
        _
      $region40: #{upsampler_forward.3} parent=35 // pred_fallthru
        _
    $region36: #{upsampler_forward.3} parent=5 // pred_fallthru
      _
    %p1242 = scmp.le.s32.totalorder 2, %s11
    // Predicated region
    $region41: #{upsampler_forward.3} parent=5 // pred_check
      %p1243 = pneg %p1242
    $region42: #{upsampler_forward.3} parent=5 // pred_check_branch
      %1245 = sbr.rel (%p1243) target = $region44
    $region43: #{upsampler_forward.3} parent=5 // pred_region
      %s1246 = ssub.s32 %s11, 2
      // Predicated region
      $region45: #{upsampler_forward.3} parent=43 // pred_check
        %p1247 = pneg %p129
      $region46: #{upsampler_forward.3} parent=43 // pred_check_branch
        %1249 = sbr.rel (%p1247) target = $region48
      $region47: #{upsampler_forward.3} parent=43 // pred_region
        %p1250 = scmp.lt.s32.totalorder %s17, 1
        %s1251 = scalar_select %p1250, %s17, 1
        %s1252 = smul.addr %s1251, 16
        %s1253 = smul.addr %s1252, 8
        %s1254 = scalar_lea.vmem %s4, %s1253
      $region48: #{upsampler_forward.3} parent=43 // pred_fallthru
        _
    $region44: #{upsampler_forward.3} parent=5 // pred_fallthru
      _
  $region6: #{upsampler_forward.3} parent=0 // loop_footer
    %s15 = sadd.s32 1, %s11
  $region7: #{upsampler_forward.3} parent=0 // loop_footer_branch
    %10 = sbr.rel target = $region3
  $region8: #{upsampler_forward.3} parent=0 // loop_exit
    _

</llo_original>
